<compile_context>
chip_gen: v7x
topology: tpu7x:2x2x1
jax: 0.10.0
libtpu: 0.0.40
codegen_flags: <defaults>
</compile_context>

<pallas_src>
import functools
import math

import jax
import jax.numpy as jnp
import numpy as np
from jax import lax
from jax.experimental import pallas as pl
from jax.experimental.pallas import tpu as pltpu

_MASK_VALUE = -0.7 * float(np.finfo(np.float32).max)


def _layer_norm(v, w, b, eps=1e-5):
    mu = jnp.mean(v, axis=-1, keepdims=True)
    var = jnp.mean((v - mu) ** 2, axis=-1, keepdims=True)
    return (v - mu) * lax.rsqrt(var + eps) * w + b


def _pick_tile(total, target, multiple):
    """Largest divisor of `total` <= target that is a multiple of `multiple`
    (falls back to `total` itself when no such divisor exists)."""
    if total <= target:
        return total
    for t in range(target, multiple - 1, -1):
        if total % t == 0 and t % multiple == 0:
            return t
    return total


# --------------------------- kernel 1: LN1 + q/k/v ---------------------------
def _qkv_kernel(x_ref, ln1_w_ref, ln1_b_ref,
                wdq_ref, qln_w_ref, qln_b_ref, wuq_ref,
                wdkv_ref, kvln_w_ref, kvln_b_ref, wuk_ref, wuv_ref,
                q_ref, k_ref, v_ref, *, compute_dtype):
    x = x_ref[...]                                              # (tq, C) f32
    ln1 = _layer_norm(x, ln1_w_ref[...], ln1_b_ref[...]).astype(compute_dtype)

    cq = jnp.dot(ln1, wdq_ref[...], preferred_element_type=jnp.float32)
    cqn = _layer_norm(cq, qln_w_ref[...], qln_b_ref[...]).astype(compute_dtype)
    q_ref[...] = jnp.dot(cqn, wuq_ref[...],
                         preferred_element_type=jnp.float32).astype(q_ref.dtype)

    ckv = jnp.dot(ln1, wdkv_ref[...], preferred_element_type=jnp.float32)
    ckvn = _layer_norm(ckv, kvln_w_ref[...], kvln_b_ref[...]).astype(compute_dtype)
    k_ref[...] = jnp.dot(ckvn, wuk_ref[...],
                         preferred_element_type=jnp.float32).astype(k_ref.dtype)
    v_ref[...] = jnp.dot(ckvn, wuv_ref[...],
                         preferred_element_type=jnp.float32).astype(v_ref.dtype)


# ------------------ kernel 2: flash attention + W_o + residual ---------------
def _attn_kernel(q_ref, k_ref, v_ref, x_ref, wo_ref, out_ref,
                 m_scr, l_scr, acc_scr, *, t_q, t_kv, approx_recip,
                 compute_dtype):
    iq = pl.program_id(1)
    ikv = pl.program_id(2)
    hs = q_ref.shape[-1]
    scale = 1.0 / math.sqrt(hs)
    q_start = iq * t_q
    k_start = ikv * t_kv

    @pl.when(ikv == 0)
    def _init():
        m_scr[...] = jnp.full(m_scr.shape, _MASK_VALUE, jnp.float32)
        l_scr[...] = jnp.zeros(l_scr.shape, jnp.float32)
        acc_scr[...] = jnp.zeros(acc_scr.shape, jnp.float32)

    # Skip KV tiles lying fully above the causal diagonal for this Q tile.
    @pl.when(k_start <= q_start + t_q - 1)
    def _update():
        qh = q_ref[...]                                         # (H, tq,  hs)
        kh = k_ref[...]                                         # (H, tkv, hs)
        vh = v_ref[...]                                         # (H, tkv, hs)
        s = jnp.einsum("hqd,hkd->hqk", qh, kh,
                       preferred_element_type=jnp.float32) * scale
        rows = q_start + lax.broadcasted_iota(jnp.int32, s.shape, 1)
        cols = k_start + lax.broadcasted_iota(jnp.int32, s.shape, 2)
        s = jnp.where(rows >= cols, s, _MASK_VALUE)

        m_prev = m_scr[...]
        m_new = jnp.maximum(m_prev, jnp.max(s, axis=-1, keepdims=True))
        alpha = jnp.exp(m_prev - m_new)
        p = jnp.exp(s - m_new)
        l_scr[...] = alpha * l_scr[...] + jnp.sum(p, axis=-1, keepdims=True)
        acc_scr[...] = alpha * acc_scr[...] + jnp.einsum(
            "hqk,hkd->hqd", p.astype(compute_dtype), vh,
            preferred_element_type=jnp.float32)
        m_scr[...] = m_new

    @pl.when(ikv == pl.num_programs(2) - 1)
    def _finalize():
        inv_l = pl.reciprocal(l_scr[...], approx=approx_recip)
        y = (acc_scr[...] * inv_l).astype(compute_dtype)        # (H, tq, hs)
        # Per-head output projection summed over heads == concat(y) @ W_o.
        attn = jnp.einsum("hqd,hdc->hqc", y, wo_ref[...],
                          preferred_element_type=jnp.float32)
        out_ref[...] = (x_ref[...] + jnp.sum(attn, axis=0)).astype(out_ref.dtype)


# ----------------------- kernel 3: LN2 + GELU FFN + residual -----------------
def _ffn_kernel(x1_ref, ln2_w_ref, ln2_b_ref, w1_ref, b1_ref, w2_ref, b2_ref,
                out_ref, ln2_scr, acc_scr, *, compute_dtype):
    n = pl.program_id(2)

    @pl.when(n == 0)
    def _init():
        x1 = x1_ref[...]                                        # (tq, C) f32
        ln2_scr[...] = _layer_norm(
            x1, ln2_w_ref[...], ln2_b_ref[...]).astype(compute_dtype)
        acc_scr[...] = x1 + b2_ref[...]                         # residual + bias2

    h = jnp.dot(ln2_scr[...], w1_ref[...],
                preferred_element_type=jnp.float32) + b1_ref[...]
    h = 0.5 * h * (1.0 + lax.erf(h * (1.0 / math.sqrt(2.0))))   # exact GELU
    acc_scr[...] += jnp.dot(h.astype(compute_dtype), w2_ref[...],
                            preferred_element_type=jnp.float32)

    @pl.when(n == pl.num_programs(2) - 1)
    def _finalize():
        out_ref[...] = acc_scr[...].astype(out_ref.dtype)


# --------------------------------- wrapper -----------------------------------
def block_forward(x, params, num_heads, *, compute_dtype=jnp.float32,
                  t_tile=256, ffn_tile=512):
    (ln1_w, ln1_b, W_dq, qln_w, qln_b, W_uq, W_dkv, kvln_w, kvln_b,
     W_uk, W_uv, W_o, ln2_w, ln2_b, W1, b1, W2, b2) = params
    B, T, C = x.shape
    H = num_heads
    assert C % H == 0
    hs = C // H
    Dq = W_dq.shape[1]
    Dkv = W_dkv.shape[1]
    Fh = W1.shape[1]
    cdt = compute_dtype

    # Matmul weights in the compute dtype (bf16 -> MXU); LN params/biases f32.
    (W_dq, W_uq, W_dkv, W_uk, W_uv, W_o, W1, W2) = (
        w.astype(cdt) for w in (W_dq, W_uq, W_dkv, W_uk, W_uv, W_o, W1, W2))
    # Head-split W_o so the attention kernel uses a batched per-head matmul.
    W_o_h = W_o.reshape(H, hs, C)

    tq = _pick_tile(T, t_tile, 8)        # sequence tile
    tn = _pick_tile(Fh, ffn_tile, 128)   # FFN hidden tile
    n_t = T // tq
    n_n = Fh // tn

    cparams2 = pltpu.CompilerParams(
        dimension_semantics=("parallel", "parallel"))
    cparams3 = pltpu.CompilerParams(
        dimension_semantics=("parallel", "parallel", "arbitrary"))

    const_w2 = lambda b, i: (0, 0)          # 2-D weight, 2-D grid
    const_w3 = lambda b, i, j: (0, 0)       # 2-D weight, 3-D grid
    const_wo = lambda b, i, j: (0, 0, 0)    # 3-D W_o_h, 3-D grid

    # ---- 1) LN1 + MLA latent projections -> q, k, v -------------------------
    q, k, v = pl.pallas_call(
        functools.partial(_qkv_kernel, compute_dtype=cdt),
        grid=(B, n_t),
        in_specs=[
            pl.BlockSpec((None, tq, C), lambda b, i: (b, i, 0)),
            pl.BlockSpec((1, C), const_w2), pl.BlockSpec((1, C), const_w2),
            pl.BlockSpec((C, Dq), const_w2), pl.BlockSpec((1, Dq), const_w2),
            pl.BlockSpec((1, Dq), const_w2), pl.BlockSpec((Dq, C), const_w2),
            pl.BlockSpec((C, Dkv), const_w2), pl.BlockSpec((1, Dkv), const_w2),
            pl.BlockSpec((1, Dkv), const_w2), pl.BlockSpec((Dkv, C), const_w2),
            pl.BlockSpec((Dkv, C), const_w2),
        ],
        out_specs=[pl.BlockSpec((None, tq, C), lambda b, i: (b, i, 0))] * 3,
        out_shape=[jax.ShapeDtypeStruct((B, T, C), cdt)] * 3,
        compiler_params=cparams2,
        cost_estimate=pl.CostEstimate(
            flops=int(2 * B * T * C * (2 * Dq + 3 * Dkv)),
            transcendentals=int(3 * B * T),
            bytes_accessed=int(16 * B * T * C + 4 * C * (2 * Dq + 3 * Dkv))),
    )(x, ln1_w, ln1_b, W_dq, qln_w, qln_b, W_uq,
      W_dkv, kvln_w, kvln_b, W_uk, W_uv)

    # Layout plumbing (outside the kernel): head-major q/k/v for batched attn.
    q_h = q.reshape(B, T, H, hs).transpose(0, 2, 1, 3)          # (B, H, T, hs)
    k_h = k.reshape(B, T, H, hs).transpose(0, 2, 1, 3)
    v_h = v.reshape(B, T, H, hs).transpose(0, 2, 1, 3)

    # ---- 2) flash causal attention + output projection + residual -----------
    x1 = pl.pallas_call(
        functools.partial(_attn_kernel, t_q=tq, t_kv=tq,
                          approx_recip=(cdt != jnp.float32), compute_dtype=cdt),
        grid=(B, n_t, n_t),
        in_specs=[
            pl.BlockSpec((None, H, tq, hs), lambda b, i, j: (b, 0, i, 0)),
            pl.BlockSpec((None, H, tq, hs), lambda b, i, j: (b, 0, j, 0)),
            pl.BlockSpec((None, H, tq, hs), lambda b, i, j: (b, 0, j, 0)),
            pl.BlockSpec((None, tq, C), lambda b, i, j: (b, i, 0)),
            pl.BlockSpec((H, hs, C), const_wo),
        ],
        out_specs=pl.BlockSpec((None, tq, C), lambda b, i, j: (b, i, 0)),
        out_shape=jax.ShapeDtypeStruct((B, T, C), x.dtype),
        scratch_shapes=[
            pltpu.VMEM((H, tq, 1), jnp.float32),    # running max
            pltpu.VMEM((H, tq, 1), jnp.float32),    # running denom
            pltpu.VMEM((H, tq, hs), jnp.float32),   # running numerator
        ],
        compiler_params=cparams3,
        cost_estimate=pl.CostEstimate(
            flops=int(4 * B * T * T * C + 2 * B * T * C * C),
            transcendentals=int(B * H * T * T),
            bytes_accessed=int(4 * B * T * C * 8 + 4 * C * C)),
    )(q_h, k_h, v_h, x, W_o_h)

    # ---- 3) LN2 + GELU FFN (tiled hidden dim) + residual ---------------------
    out = pl.pallas_call(
        functools.partial(_ffn_kernel, compute_dtype=cdt),
        grid=(B, n_t, n_n),
        in_specs=[
            pl.BlockSpec((None, tq, C), lambda b, i, n: (b, i, 0)),
            pl.BlockSpec((1, C), const_w3), pl.BlockSpec((1, C), const_w3),
            pl.BlockSpec((C, tn), lambda b, i, n: (0, n)),
            pl.BlockSpec((1, tn), lambda b, i, n: (0, n)),
            pl.BlockSpec((tn, C), lambda b, i, n: (n, 0)),
            pl.BlockSpec((1, C), const_w3),
        ],
        out_specs=pl.BlockSpec((None, tq, C), lambda b, i, n: (b, i, 0)),
        out_shape=jax.ShapeDtypeStruct((B, T, C), x.dtype),
        scratch_shapes=[
            pltpu.VMEM((tq, C), cdt),           # cached LayerNorm(x1)
            pltpu.VMEM((tq, C), jnp.float32),   # f32 accumulator (residual+FFN)
        ],
        compiler_params=cparams3,
        cost_estimate=pl.CostEstimate(
            flops=int(4 * B * T * C * Fh),
            transcendentals=int(B * T * Fh),
            bytes_accessed=int(4 * (2 * B * T * C + 2 * C * Fh))),
    )(x1, ln2_w, ln2_b, W1, b1, W2, b2)

    return out


# ------------------------------ params / reference ---------------------------
def init_params(key, n_embd, q_comp, kv_comp):
    """Deterministic synthetic weights. Linear weights stored pre-transposed as
    (in, out) so kernels do x @ W directly; vectors stored as (1, N)."""
    ks = jax.random.split(key, 10)
    s = 0.05
    p = {}
    p["ln1_w"] = jnp.ones((1, n_embd), jnp.float32)
    p["ln1_b"] = jnp.zeros((1, n_embd), jnp.float32)
    p["W_dq"] = jax.random.normal(ks[0], (n_embd, q_comp), jnp.float32) * s
    p["qln_w"] = jnp.ones((1, q_comp), jnp.float32)
    p["qln_b"] = jnp.zeros((1, q_comp), jnp.float32)
    p["W_uq"] = jax.random.normal(ks[1], (q_comp, n_embd), jnp.float32) * s
    p["W_dkv"] = jax.random.normal(ks[2], (n_embd, kv_comp), jnp.float32) * s
    p["kvln_w"] = jnp.ones((1, kv_comp), jnp.float32)
    p["kvln_b"] = jnp.zeros((1, kv_comp), jnp.float32)
    p["W_uk"] = jax.random.normal(ks[3], (kv_comp, n_embd), jnp.float32) * s
    p["W_uv"] = jax.random.normal(ks[4], (kv_comp, n_embd), jnp.float32) * s
    p["W_o"] = jax.random.normal(ks[5], (n_embd, n_embd), jnp.float32) * s
    p["ln2_w"] = jnp.ones((1, n_embd), jnp.float32)
    p["ln2_b"] = jnp.zeros((1, n_embd), jnp.float32)
    p["W1"] = jax.random.normal(ks[6], (n_embd, 4 * n_embd), jnp.float32) * s
    p["b1"] = jax.random.normal(ks[7], (1, 4 * n_embd), jnp.float32) * s
    p["W2"] = jax.random.normal(ks[8], (4 * n_embd, n_embd), jnp.float32) * s
    p["b2"] = jax.random.normal(ks[9], (1, n_embd), jnp.float32) * s
    order = ["ln1_w", "ln1_b", "W_dq", "qln_w", "qln_b", "W_uq", "W_dkv",
             "kvln_w", "kvln_b", "W_uk", "W_uv", "W_o", "ln2_w", "ln2_b",
             "W1", "b1", "W2", "b2"]
    return [p[k] for k in order]


def reference_forward(x, params, num_heads):
    """Pure-JAX reference mirroring the PyTorch Block (eval mode)."""
    (ln1_w, ln1_b, W_dq, qln_w, qln_b, W_uq, W_dkv, kvln_w, kvln_b,
     W_uk, W_uv, W_o, ln2_w, ln2_b, W1, b1, W2, b2) = params
    B, T, C = x.shape
    hs = C // num_heads

    ln1 = _layer_norm(x, ln1_w[0], ln1_b[0])
    q = _layer_norm(ln1 @ W_dq, qln_w[0], qln_b[0]) @ W_uq
    ckvn = _layer_norm(ln1 @ W_dkv, kvln_w[0], kvln_b[0])
    k = ckvn @ W_uk
    v = ckvn @ W_uv
    qh = q.reshape(B, T, num_heads, hs).transpose(0, 2, 1, 3)
    kh = k.reshape(B, T, num_heads, hs).transpose(0, 2, 1, 3)
    vh = v.reshape(B, T, num_heads, hs).transpose(0, 2, 1, 3)
    s = jnp.einsum("bhqd,bhkd->bhqk", qh, kh) / jnp.sqrt(float(hs))
    mask = jnp.tril(jnp.ones((T, T), bool))
    s = jnp.where(mask, s, -jnp.inf)
    p = jax.nn.softmax(s, axis=-1)
    y = jnp.einsum("bhqk,bhkd->bhqd", p, vh).transpose(0, 2, 1, 3).reshape(B, T, C)
    x1 = x + y @ W_o
    ln2 = _layer_norm(x1, ln2_w[0], ln2_b[0])
    h1 = ln2 @ W1 + b1[0]
    h1 = 0.5 * h1 * (1.0 + jax.lax.erf(h1 / jnp.sqrt(2.0)))
    return x1 + (h1 @ W2 + b2[0])


if __name__ == "__main__":
    key = jax.random.PRNGKey(0)
    kx, kp = jax.random.split(key)

    # Small config consistent with the module: B=2, T=8, C=32, 4 heads,
    # q/kv compression dims 16.
    B, T, n_embd, n_head = 2, 8, 32, 4
    q_comp, kv_comp = 16, 16
    x = jax.random.normal(kx, (B, T, n_embd), jnp.float32)
    params = init_params(kp, n_embd, q_comp, kv_comp)
    ref = reference_forward(x, params, n_head)

    out = jax.block_until_ready(block_forward(x, params, n_head))
    np.testing.assert_allclose(np.asarray(out), np.asarray(ref),
                               rtol=1e-4, atol=1e-4)

    # bf16 matmul path (MXU-friendly on v6e/v7x) -- looser tolerance.
    out_bf16 = jax.block_until_ready(
        block_forward(x, params, n_head, compute_dtype=jnp.bfloat16))
    np.testing.assert_allclose(np.asarray(out_bf16), np.asarray(ref),
                               rtol=3e-2, atol=3e-2)

    # A moderate config that actually exercises the sequence / KV / FFN-hidden
    # tiling (2 query tiles x 2 kv tiles x 2 FFN-hidden tiles per batch elem).
    kx2, kp2 = jax.random.split(jax.random.PRNGKey(1))
    B2, T2, C2, H2 = 2, 256, 128, 4
    x2 = jax.random.normal(kx2, (B2, T2, C2), jnp.float32)
    params2 = init_params(kp2, C2, 64, 64)
    out2 = jax.block_until_ready(
        block_forward(x2, params2, H2, t_tile=128, ffn_tile=256))
    ref2 = reference_forward(x2, params2, H2)
    np.testing.assert_allclose(np.asarray(out2), np.asarray(ref2),
                               rtol=1e-2, atol=1e-2)

    print("KERNEL_OK")
</pallas_src>

<mosaic_0001>
module attributes {stable_mosaic.version = 11 : i64} {
  func.func @_qkv_kernel(%arg0: i32, %arg1: i32, %arg2: memref<1x8x32xf32, #tpu.memory_space<vmem>>, %arg3: memref<1x32xf32, #tpu.memory_space<vmem>>, %arg4: memref<1x32xf32, #tpu.memory_space<vmem>>, %arg5: memref<32x16xf32, #tpu.memory_space<vmem>>, %arg6: memref<1x16xf32, #tpu.memory_space<vmem>>, %arg7: memref<1x16xf32, #tpu.memory_space<vmem>>, %arg8: memref<16x32xf32, #tpu.memory_space<vmem>>, %arg9: memref<32x16xf32, #tpu.memory_space<vmem>>, %arg10: memref<1x16xf32, #tpu.memory_space<vmem>>, %arg11: memref<1x16xf32, #tpu.memory_space<vmem>>, %arg12: memref<16x32xf32, #tpu.memory_space<vmem>>, %arg13: memref<16x32xf32, #tpu.memory_space<vmem>>, %arg14: memref<1x8x32xf32, #tpu.memory_space<vmem>>, %arg15: memref<1x8x32xf32, #tpu.memory_space<vmem>>, %arg16: memref<1x8x32xf32, #tpu.memory_space<vmem>>) attributes {dimension_semantics = [#tpu.dimension_semantics<parallel>, #tpu.dimension_semantics<parallel>], iteration_bounds = array<i64: 2, 1>, scalar_prefetch = 0 : i64, scratch_operands = 0 : i64, tpu.core_type = #tpu.core_type<tc>, window_params = [{transform_indices = @transform_0, window_bounds = array<i64: 1, 8, 32>}, {pipeline_mode = #tpu.pipeline_mode<synchronous>, transform_indices = @transform_1, window_bounds = array<i64: 1, 32>}, {pipeline_mode = #tpu.pipeline_mode<synchronous>, transform_indices = @transform_2, window_bounds = array<i64: 1, 32>}, {pipeline_mode = #tpu.pipeline_mode<synchronous>, transform_indices = @transform_3, window_bounds = array<i64: 32, 16>}, {pipeline_mode = #tpu.pipeline_mode<synchronous>, transform_indices = @transform_4, window_bounds = array<i64: 1, 16>}, {pipeline_mode = #tpu.pipeline_mode<synchronous>, transform_indices = @transform_5, window_bounds = array<i64: 1, 16>}, {pipeline_mode = #tpu.pipeline_mode<synchronous>, transform_indices = @transform_6, window_bounds = array<i64: 16, 32>}, {pipeline_mode = #tpu.pipeline_mode<synchronous>, transform_indices = @transform_7, window_bounds = array<i64: 32, 16>}, {pipeline_mode = #tpu.pipeline_mode<synchronous>, transform_indices = @transform_8, window_bounds = array<i64: 1, 16>}, {pipeline_mode = #tpu.pipeline_mode<synchronous>, transform_indices = @transform_9, window_bounds = array<i64: 1, 16>}, {pipeline_mode = #tpu.pipeline_mode<synchronous>, transform_indices = @transform_10, window_bounds = array<i64: 16, 32>}, {pipeline_mode = #tpu.pipeline_mode<synchronous>, transform_indices = @transform_11, window_bounds = array<i64: 16, 32>}, {transform_indices = @transform_12, window_bounds = array<i64: 1, 8, 32>}, {transform_indices = @transform_13, window_bounds = array<i64: 1, 8, 32>}, {transform_indices = @transform_14, window_bounds = array<i64: 1, 8, 32>}]} {
    %c0 = arith.constant 0 : index
    %c0_0 = arith.constant 0 : index
    %c0_1 = arith.constant 0 : index
    %0 = vector.load %arg2[%c0, %c0_0, %c0_1] : memref<1x8x32xf32, #tpu.memory_space<vmem>>, vector<1x8x32xf32>
    %1 = vector.shape_cast %0 : vector<1x8x32xf32> to vector<8x32xf32>
    %c0_2 = arith.constant 0 : index
    %c0_3 = arith.constant 0 : index
    %2 = vector.load %arg3[%c0_2, %c0_3] : memref<1x32xf32, #tpu.memory_space<vmem>>, vector<1x32xf32>
    %c0_4 = arith.constant 0 : index
    %c0_5 = arith.constant 0 : index
    %3 = vector.load %arg4[%c0_4, %c0_5] : memref<1x32xf32, #tpu.memory_space<vmem>>, vector<1x32xf32>
    %cst = arith.constant dense<0.000000e+00> : vector<8xf32>
    %4 = vector.multi_reduction <add>, %1, %cst [1] : vector<8x32xf32> to vector<8xf32>
    %5 = vector.shape_cast %4 : vector<8xf32> to vector<8x1xf32>
    %cst_6 = arith.constant 3.200000e+01 : f32
    %6 = vector.broadcast %cst_6 : f32 to vector<8x1xf32>
    %7 = arith.divf %5, %6 : vector<8x1xf32>
    %8 = vector.broadcast %7 : vector<8x1xf32> to vector<8x32xf32>
    %9 = arith.subf %1, %8 : vector<8x32xf32>
    %10 = arith.mulf %9, %9 : vector<8x32xf32>
    %cst_7 = arith.constant dense<0.000000e+00> : vector<8xf32>
    %11 = vector.multi_reduction <add>, %10, %cst_7 [1] : vector<8x32xf32> to vector<8xf32>
    %12 = vector.shape_cast %11 : vector<8xf32> to vector<8x1xf32>
    %cst_8 = arith.constant 3.200000e+01 : f32
    %13 = vector.broadcast %cst_8 : f32 to vector<8x1xf32>
    %14 = arith.divf %12, %13 : vector<8x1xf32>
    %15 = vector.broadcast %7 : vector<8x1xf32> to vector<8x32xf32>
    %16 = arith.subf %1, %15 : vector<8x32xf32>
    %cst_9 = arith.constant 9.99999974E-6 : f32
    %17 = vector.broadcast %cst_9 : f32 to vector<8x1xf32>
    %18 = arith.addf %14, %17 : vector<8x1xf32>
    %19 = math.rsqrt %18 : vector<8x1xf32>
    %20 = vector.broadcast %19 : vector<8x1xf32> to vector<8x32xf32>
    %21 = arith.mulf %16, %20 : vector<8x32xf32>
    %22 = vector.broadcast %2 : vector<1x32xf32> to vector<8x32xf32>
    %23 = arith.mulf %21, %22 : vector<8x32xf32>
    %24 = vector.broadcast %3 : vector<1x32xf32> to vector<8x32xf32>
    %25 = arith.addf %23, %24 : vector<8x32xf32>
    %c0_10 = arith.constant 0 : index
    %c0_11 = arith.constant 0 : index
    %26 = vector.load %arg5[%c0_10, %c0_11] : memref<32x16xf32, #tpu.memory_space<vmem>>, vector<32x16xf32>
    %cst_12 = arith.constant dense<0.000000e+00> : vector<8x16xf32>
    %27 = tpu.matmul %25, %26, %cst_12 {dimension_numbers = #tpu.dot_dimension_numbers<[1], [0], [0], [1], [0, 0, 1, 1], [], []>} : vector<8x32xf32>, vector<32x16xf32>, vector<8x16xf32> -> vector<8x16xf32>
    %c0_13 = arith.constant 0 : index
    %c0_14 = arith.constant 0 : index
    %28 = vector.load %arg6[%c0_13, %c0_14] : memref<1x16xf32, #tpu.memory_space<vmem>>, vector<1x16xf32>
    %c0_15 = arith.constant 0 : index
    %c0_16 = arith.constant 0 : index
    %29 = vector.load %arg7[%c0_15, %c0_16] : memref<1x16xf32, #tpu.memory_space<vmem>>, vector<1x16xf32>
    %cst_17 = arith.constant dense<0.000000e+00> : vector<8xf32>
    %30 = vector.multi_reduction <add>, %27, %cst_17 [1] : vector<8x16xf32> to vector<8xf32>
    %31 = vector.shape_cast %30 : vector<8xf32> to vector<8x1xf32>
    %cst_18 = arith.constant 1.600000e+01 : f32
    %32 = vector.broadcast %cst_18 : f32 to vector<8x1xf32>
    %33 = arith.divf %31, %32 : vector<8x1xf32>
    %34 = vector.broadcast %33 : vector<8x1xf32> to vector<8x16xf32>
    %35 = arith.subf %27, %34 : vector<8x16xf32>
    %36 = arith.mulf %35, %35 : vector<8x16xf32>
    %cst_19 = arith.constant dense<0.000000e+00> : vector<8xf32>
    %37 = vector.multi_reduction <add>, %36, %cst_19 [1] : vector<8x16xf32> to vector<8xf32>
    %38 = vector.shape_cast %37 : vector<8xf32> to vector<8x1xf32>
    %cst_20 = arith.constant 1.600000e+01 : f32
    %39 = vector.broadcast %cst_20 : f32 to vector<8x1xf32>
    %40 = arith.divf %38, %39 : vector<8x1xf32>
    %41 = vector.broadcast %33 : vector<8x1xf32> to vector<8x16xf32>
    %42 = arith.subf %27, %41 : vector<8x16xf32>
    %cst_21 = arith.constant 9.99999974E-6 : f32
    %43 = vector.broadcast %cst_21 : f32 to vector<8x1xf32>
    %44 = arith.addf %40, %43 : vector<8x1xf32>
    %45 = math.rsqrt %44 : vector<8x1xf32>
    %46 = vector.broadcast %45 : vector<8x1xf32> to vector<8x16xf32>
    %47 = arith.mulf %42, %46 : vector<8x16xf32>
    %48 = vector.broadcast %28 : vector<1x16xf32> to vector<8x16xf32>
    %49 = arith.mulf %47, %48 : vector<8x16xf32>
    %50 = vector.broadcast %29 : vector<1x16xf32> to vector<8x16xf32>
    %51 = arith.addf %49, %50 : vector<8x16xf32>
    %c0_22 = arith.constant 0 : index
    %c0_23 = arith.constant 0 : index
    %52 = vector.load %arg8[%c0_22, %c0_23] : memref<16x32xf32, #tpu.memory_space<vmem>>, vector<16x32xf32>
    %cst_24 = arith.constant dense<0.000000e+00> : vector<8x32xf32>
    %53 = tpu.matmul %51, %52, %cst_24 {dimension_numbers = #tpu.dot_dimension_numbers<[1], [0], [0], [1], [0, 0, 1, 1], [], []>} : vector<8x16xf32>, vector<16x32xf32>, vector<8x32xf32> -> vector<8x32xf32>
    %c0_25 = arith.constant 0 : index
    %c0_26 = arith.constant 0 : index
    %c0_27 = arith.constant 0 : index
    %54 = vector.load %arg14[%c0_25, %c0_26, %c0_27] : memref<1x8x32xf32, #tpu.memory_space<vmem>>, vector<1x8x32xf32>
    %55 = vector.shape_cast %54 : vector<1x8x32xf32> to vector<8x32xf32>
    %56 = vector.shape_cast %53 : vector<8x32xf32> to vector<1x8x32xf32>
    tpu.vector_store %arg14[%c0_25, %c0_26, %c0_27], %56 {strides = array<i32>} : memref<1x8x32xf32, #tpu.memory_space<vmem>>, vector<1x8x32xf32>,
    %c0_28 = arith.constant 0 : index
    %c0_29 = arith.constant 0 : index
    %57 = vector.load %arg9[%c0_28, %c0_29] : memref<32x16xf32, #tpu.memory_space<vmem>>, vector<32x16xf32>
    %cst_30 = arith.constant dense<0.000000e+00> : vector<8x16xf32>
    %58 = tpu.matmul %25, %57, %cst_30 {dimension_numbers = #tpu.dot_dimension_numbers<[1], [0], [0], [1], [0, 0, 1, 1], [], []>} : vector<8x32xf32>, vector<32x16xf32>, vector<8x16xf32> -> vector<8x16xf32>
    %c0_31 = arith.constant 0 : index
    %c0_32 = arith.constant 0 : index
    %59 = vector.load %arg10[%c0_31, %c0_32] : memref<1x16xf32, #tpu.memory_space<vmem>>, vector<1x16xf32>
    %c0_33 = arith.constant 0 : index
    %c0_34 = arith.constant 0 : index
    %60 = vector.load %arg11[%c0_33, %c0_34] : memref<1x16xf32, #tpu.memory_space<vmem>>, vector<1x16xf32>
    %cst_35 = arith.constant dense<0.000000e+00> : vector<8xf32>
    %61 = vector.multi_reduction <add>, %58, %cst_35 [1] : vector<8x16xf32> to vector<8xf32>
    %62 = vector.shape_cast %61 : vector<8xf32> to vector<8x1xf32>
    %cst_36 = arith.constant 1.600000e+01 : f32
    %63 = vector.broadcast %cst_36 : f32 to vector<8x1xf32>
    %64 = arith.divf %62, %63 : vector<8x1xf32>
    %65 = vector.broadcast %64 : vector<8x1xf32> to vector<8x16xf32>
    %66 = arith.subf %58, %65 : vector<8x16xf32>
    %67 = arith.mulf %66, %66 : vector<8x16xf32>
    %cst_37 = arith.constant dense<0.000000e+00> : vector<8xf32>
    %68 = vector.multi_reduction <add>, %67, %cst_37 [1] : vector<8x16xf32> to vector<8xf32>
    %69 = vector.shape_cast %68 : vector<8xf32> to vector<8x1xf32>
    %cst_38 = arith.constant 1.600000e+01 : f32
    %70 = vector.broadcast %cst_38 : f32 to vector<8x1xf32>
    %71 = arith.divf %69, %70 : vector<8x1xf32>
    %72 = vector.broadcast %64 : vector<8x1xf32> to vector<8x16xf32>
    %73 = arith.subf %58, %72 : vector<8x16xf32>
    %cst_39 = arith.constant 9.99999974E-6 : f32
    %74 = vector.broadcast %cst_39 : f32 to vector<8x1xf32>
    %75 = arith.addf %71, %74 : vector<8x1xf32>
    %76 = math.rsqrt %75 : vector<8x1xf32>
    %77 = vector.broadcast %76 : vector<8x1xf32> to vector<8x16xf32>
    %78 = arith.mulf %73, %77 : vector<8x16xf32>
    %79 = vector.broadcast %59 : vector<1x16xf32> to vector<8x16xf32>
    %80 = arith.mulf %78, %79 : vector<8x16xf32>
    %81 = vector.broadcast %60 : vector<1x16xf32> to vector<8x16xf32>
    %82 = arith.addf %80, %81 : vector<8x16xf32>
    %c0_40 = arith.constant 0 : index
    %c0_41 = arith.constant 0 : index
    %83 = vector.load %arg12[%c0_40, %c0_41] : memref<16x32xf32, #tpu.memory_space<vmem>>, vector<16x32xf32>
    %cst_42 = arith.constant dense<0.000000e+00> : vector<8x32xf32>
    %84 = tpu.matmul %82, %83, %cst_42 {dimension_numbers = #tpu.dot_dimension_numbers<[1], [0], [0], [1], [0, 0, 1, 1], [], []>} : vector<8x16xf32>, vector<16x32xf32>, vector<8x32xf32> -> vector<8x32xf32>
    %c0_43 = arith.constant 0 : index
    %c0_44 = arith.constant 0 : index
    %c0_45 = arith.constant 0 : index
    %85 = vector.load %arg15[%c0_43, %c0_44, %c0_45] : memref<1x8x32xf32, #tpu.memory_space<vmem>>, vector<1x8x32xf32>
    %86 = vector.shape_cast %85 : vector<1x8x32xf32> to vector<8x32xf32>
    %87 = vector.shape_cast %84 : vector<8x32xf32> to vector<1x8x32xf32>
    tpu.vector_store %arg15[%c0_43, %c0_44, %c0_45], %87 {strides = array<i32>} : memref<1x8x32xf32, #tpu.memory_space<vmem>>, vector<1x8x32xf32>,
    %c0_46 = arith.constant 0 : index
    %c0_47 = arith.constant 0 : index
    %88 = vector.load %arg13[%c0_46, %c0_47] : memref<16x32xf32, #tpu.memory_space<vmem>>, vector<16x32xf32>
    %cst_48 = arith.constant dense<0.000000e+00> : vector<8x32xf32>
    %89 = tpu.matmul %82, %88, %cst_48 {dimension_numbers = #tpu.dot_dimension_numbers<[1], [0], [0], [1], [0, 0, 1, 1], [], []>} : vector<8x16xf32>, vector<16x32xf32>, vector<8x32xf32> -> vector<8x32xf32>
    %c0_49 = arith.constant 0 : index
    %c0_50 = arith.constant 0 : index
    %c0_51 = arith.constant 0 : index
    %90 = vector.load %arg16[%c0_49, %c0_50, %c0_51] : memref<1x8x32xf32, #tpu.memory_space<vmem>>, vector<1x8x32xf32>
    %91 = vector.shape_cast %90 : vector<1x8x32xf32> to vector<8x32xf32>
    %92 = vector.shape_cast %89 : vector<8x32xf32> to vector<1x8x32xf32>
    tpu.vector_store %arg16[%c0_49, %c0_50, %c0_51], %92 {strides = array<i32>} : memref<1x8x32xf32, #tpu.memory_space<vmem>>, vector<1x8x32xf32>,
    return
  }
  func.func @transform_0(%arg0: i32, %arg1: i32) -> (i32, i32, i32) {
    %c0_i32 = arith.constant 0 : i32
    %c0_i32_0 = arith.constant 0 : i32
    return %arg0, %arg1, %c0_i32 : i32, i32, i32
  }
  func.func @transform_1(%arg0: i32, %arg1: i32) -> (i32, i32) {
    %c0_i32 = arith.constant 0 : i32
    %c0_i32_0 = arith.constant 0 : i32
    %c0_i32_1 = arith.constant 0 : i32
    return %c0_i32, %c0_i32_0 : i32, i32
  }
  func.func @transform_2(%arg0: i32, %arg1: i32) -> (i32, i32) {
    %c0_i32 = arith.constant 0 : i32
    %c0_i32_0 = arith.constant 0 : i32
    %c0_i32_1 = arith.constant 0 : i32
    return %c0_i32, %c0_i32_0 : i32, i32
  }
  func.func @transform_3(%arg0: i32, %arg1: i32) -> (i32, i32) {
    %c0_i32 = arith.constant 0 : i32
    %c0_i32_0 = arith.constant 0 : i32
    %c0_i32_1 = arith.constant 0 : i32
    return %c0_i32, %c0_i32_0 : i32, i32
  }
  func.func @transform_4(%arg0: i32, %arg1: i32) -> (i32, i32) {
    %c0_i32 = arith.constant 0 : i32
    %c0_i32_0 = arith.constant 0 : i32
    %c0_i32_1 = arith.constant 0 : i32
    return %c0_i32, %c0_i32_0 : i32, i32
  }
  func.func @transform_5(%arg0: i32, %arg1: i32) -> (i32, i32) {
    %c0_i32 = arith.constant 0 : i32
    %c0_i32_0 = arith.constant 0 : i32
    %c0_i32_1 = arith.constant 0 : i32
    return %c0_i32, %c0_i32_0 : i32, i32
  }
  func.func @transform_6(%arg0: i32, %arg1: i32) -> (i32, i32) {
    %c0_i32 = arith.constant 0 : i32
    %c0_i32_0 = arith.constant 0 : i32
    %c0_i32_1 = arith.constant 0 : i32
    return %c0_i32, %c0_i32_0 : i32, i32
  }
  func.func @transform_7(%arg0: i32, %arg1: i32) -> (i32, i32) {
    %c0_i32 = arith.constant 0 : i32
    %c0_i32_0 = arith.constant 0 : i32
    %c0_i32_1 = arith.constant 0 : i32
    return %c0_i32, %c0_i32_0 : i32, i32
  }
  func.func @transform_8(%arg0: i32, %arg1: i32) -> (i32, i32) {
    %c0_i32 = arith.constant 0 : i32
    %c0_i32_0 = arith.constant 0 : i32
    %c0_i32_1 = arith.constant 0 : i32
    return %c0_i32, %c0_i32_0 : i32, i32
  }
  func.func @transform_9(%arg0: i32, %arg1: i32) -> (i32, i32) {
    %c0_i32 = arith.constant 0 : i32
    %c0_i32_0 = arith.constant 0 : i32
    %c0_i32_1 = arith.constant 0 : i32
    return %c0_i32, %c0_i32_0 : i32, i32
  }
  func.func @transform_10(%arg0: i32, %arg1: i32) -> (i32, i32) {
    %c0_i32 = arith.constant 0 : i32
    %c0_i32_0 = arith.constant 0 : i32
    %c0_i32_1 = arith.constant 0 : i32
    return %c0_i32, %c0_i32_0 : i32, i32
  }
  func.func @transform_11(%arg0: i32, %arg1: i32) -> (i32, i32) {
    %c0_i32 = arith.constant 0 : i32
    %c0_i32_0 = arith.constant 0 : i32
    %c0_i32_1 = arith.constant 0 : i32
    return %c0_i32, %c0_i32_0 : i32, i32
  }
  func.func @transform_12(%arg0: i32, %arg1: i32) -> (i32, i32, i32) {
    %c0_i32 = arith.constant 0 : i32
    %c0_i32_0 = arith.constant 0 : i32
    return %arg0, %arg1, %c0_i32 : i32, i32, i32
  }
  func.func @transform_13(%arg0: i32, %arg1: i32) -> (i32, i32, i32) {
    %c0_i32 = arith.constant 0 : i32
    %c0_i32_0 = arith.constant 0 : i32
    return %arg0, %arg1, %c0_i32 : i32, i32, i32
  }
  func.func @transform_14(%arg0: i32, %arg1: i32) -> (i32, i32, i32) {
    %c0_i32 = arith.constant 0 : i32
    %c0_i32_0 = arith.constant 0 : i32
    return %arg0, %arg1, %c0_i32 : i32, i32, i32
  }
}

</mosaic_0001>

<llo_original>
// kernel: tpu_custom_call.1
$region0: #{tpu_custom_call.1}
  #allocation0 [shape = 'u32[]', space=smem, size = 0x4, offset = 0x4, fixed_abs, tag = 'smem constant byte address 0x4 - core index']
  #allocation1 [shape = 'u32[144,128]{1,0:T(1,128)}', space=vmem, size = 0x12000, scoped, tag = 'internal scratch']
  %s0 = inlined_call_operand.vmem [shape: f32[2,8,32], index: 0, kind: input, shape index: {}]
  %s1 = inlined_call_operand.vmem [shape: f32[1,32], index: 1, kind: input, shape index: {}]
  %s2 = inlined_call_operand.vmem [shape: f32[1,32], index: 2, kind: input, shape index: {}]
  %s3 = inlined_call_operand.vmem [shape: f32[32,16], index: 3, kind: input, shape index: {}]
  %s4 = inlined_call_operand.vmem [shape: f32[1,16], index: 4, kind: input, shape index: {}]
  %s5 = inlined_call_operand.vmem [shape: f32[1,16], index: 5, kind: input, shape index: {}]
  %s6 = inlined_call_operand.vmem [shape: f32[16,32], index: 6, kind: input, shape index: {}]
  %s7 = inlined_call_operand.vmem [shape: f32[32,16], index: 7, kind: input, shape index: {}]
  %s8 = inlined_call_operand.vmem [shape: f32[1,16], index: 8, kind: input, shape index: {}]
  %s9 = inlined_call_operand.vmem [shape: f32[1,16], index: 9, kind: input, shape index: {}]
  %s10 = inlined_call_operand.vmem [shape: f32[16,32], index: 10, kind: input, shape index: {}]
  %s11 = inlined_call_operand.vmem [shape: f32[16,32], index: 11, kind: input, shape index: {}]
  %s12 = inlined_call_operand.hbm [shape: f32[2,8,32], index: 12, kind: output, shape index: {0}]
  %s13 = inlined_call_operand.hbm [shape: f32[2,8,32], index: 13, kind: output, shape index: {1}]
  %s14 = inlined_call_operand.hbm [shape: f32[2,8,32], index: 14, kind: output, shape index: {2}]
  %15 = xla_tuple %s12, %s13, %s14
  %s16 = sld [smem:[#allocation0]]
  $region97: #{tpu_custom_call.1} parent=0
    _
  %s18 = ssub.s32 1, %s16
  %s19 = scalar_select 0, %s18, %s16
  $region1: #{tpu_custom_call.1} parent=0
    #allocation2 [shape = 'u8[8192]{0}', space=vmem, size = 0x2000, scoped, tag = 'output window, operand 0']
    #allocation3 [shape = 's32[2]{0}', space=sflag, size = 0x8, scoped, tag = 'scoped memory for tpu_custom_call.1']
    #allocation4 [shape = 'u8[8192]{0}', space=vmem, size = 0x2000, scoped, tag = 'output window, operand 1']
    #allocation5 [shape = 's32[2]{0}', space=sflag, size = 0x8, scoped, tag = 'scoped memory for tpu_custom_call.1']
    #allocation6 [shape = 'u8[8192]{0}', space=vmem, size = 0x2000, scoped, tag = 'output window, operand 2']
    %20 = vsyncpa [#allocation3], 0
    %s21 = scalar_lea.sflag [#allocation3], 1
    %22 = vsyncpa %s21, 0
    %23 = vsyncpa [#allocation5], 0
    %s24 = scalar_lea.sflag [#allocation5], 1
    %25 = vsyncpa %s24, 0
    loop: start=0, step=1, limit=4
    $region2: #{tpu_custom_call.1} parent=1 // loop_pre_header
      _
    $region3: #{tpu_custom_call.1} parent=1 // loop_header
      %s27 = sphi 0, %s31
      %p28 = scmp.ge.s32.totalorder %s27, 4
      %s34 = sphi 0, %s46
      %s35 = sphi 0, %s42
      %s36 = sphi 0, %s34
      %s37 = sphi 0, %s35
      %s38 = sphi 0, %s36
      %s39 = sphi 0, %s37
      %s51 = sphi 0, %s53
      %s54 = sphi 0, %s51
      %s55 = sphi 0, %s54
      %s71 = sphi 0, %s55
      %s75 = sphi 0, %s75
      %s77 = sphi 0, %s75
      %s78 = sphi 0, %s77
      %s92 = sphi 0, %s78
      %s96 = sphi 0, %s96
      %s98 = sphi 0, %s96
      %s99 = sphi 0, %s98
      %s113 = sphi 0, %s99
      %s117 = sphi 0, %s117
      %s119 = sphi 0, %s117
      %s120 = sphi 0, %s119
      %s134 = sphi 0, %s120
      %s138 = sphi 0, %s138
      %s140 = sphi 0, %s138
      %s141 = sphi 0, %s140
      %s155 = sphi 0, %s141
      %s159 = sphi 0, %s159
      %s161 = sphi 0, %s159
      %s162 = sphi 0, %s161
      %s176 = sphi 0, %s162
      %s180 = sphi 0, %s180
      %s182 = sphi 0, %s180
      %s183 = sphi 0, %s182
      %s197 = sphi 0, %s183
      %s201 = sphi 0, %s201
      %s203 = sphi 0, %s201
      %s204 = sphi 0, %s203
      %s218 = sphi 0, %s204
      %s222 = sphi 0, %s222
      %s224 = sphi 0, %s222
      %s225 = sphi 0, %s224
      %s239 = sphi 0, %s225
      %s243 = sphi 0, %s243
      %s245 = sphi 0, %s243
      %s246 = sphi 0, %s245
      %s260 = sphi 0, %s246
      %s264 = sphi 0, %s264
      %s266 = sphi 0, %s264
      %s267 = sphi 0, %s266
      %s281 = sphi 0, %s267
      %s285 = sphi 0, %s285
      %s287 = sphi 0, %s285
      %s288 = sphi 0, %s287
      %s302 = sphi 0, %s288
      %s310 = sphi 0, %s312
      %s313 = sphi 0, %s310
      %s314 = sphi 0, %s313
      %s330 = sphi 0, %s314
      %s338 = sphi 0, %s340
      %s341 = sphi 0, %s338
      %s342 = sphi 0, %s341
      %s358 = sphi 0, %s342
      %s366 = sphi 0, %s368
      %s369 = sphi 0, %s366
      %s370 = sphi 0, %s369
      %s386 = sphi 0, %s370
    $region4: #{tpu_custom_call.1} parent=1 // loop_header_branch
      %30 = sbr.rel (%p28) target = $region8
    $region5: #{tpu_custom_call.1} parent=1 // loop_body
      %s32 = ssub.s32 %s27, 1
      %s33 = ssub.s32 %s27, 2
      %s40 = sadd.s32 1, %s35
      %p41 = scmp.ge.s32.totalorder %s40, 1
      %s42 = scalar_select %p41, 0, %s40
      %s43 = sadd.s32 1, %s34
      %s44 = scalar_select %p41, %s43, %s34
      %p45 = scmp.ge.s32.totalorder %s44, 2
      %s46 = scalar_select %p45, 0, %s44
      %s47 = ssub.s32 %s34, %s46
      %s48 = ssub.s32 %s35, %s42
      %s49 = sor.u32 %s47, %s48
      %p50 = scmp.eq.s32.totalorder %s49, 0
      %s52 = sadd.s32 %s51, 1
      %s53 = scalar_select %p50, %s51, %s52
      %p56 = pneg %p50
      %p57 = scmp.eq.s32.totalorder %s27, 1
      %p58 = por %p56, %p57
      %p59 = scmp.ne.s32.totalorder %s51, %s54
      %p60 = scmp.eq.s32.totalorder %s27, 0
      %p61 = por %p59, %p60
      %p62 = scmp.ne.s32.totalorder %s51, %s54
      %p63 = scmp.eq.s32.totalorder %s32, 1
      %p64 = por %p62, %p63
      %p65 = scmp.ne.s32.totalorder %s54, %s55
      %p66 = scmp.eq.s32.totalorder %s32, 0
      %p67 = por %p65, %p66
      %p68 = scmp.ne.s32.totalorder %s54, %s55
      %p69 = scmp.eq.s32.totalorder %s33, 1
      %p70 = por %p68, %p69
      %p72 = scmp.ne.s32.totalorder %s55, %s71
      %p73 = scmp.eq.s32.totalorder %s33, 0
      %p74 = por %p72, %p73
      %s76 = sadd.s32 %s75, 1
      %p79 = scmp.eq.s32.totalorder %s27, 1
      %p80 = scmp.ne.s32.totalorder %s75, %s77
      %p81 = scmp.eq.s32.totalorder %s27, 0
      %p82 = por %p80, %p81
      %p83 = scmp.ne.s32.totalorder %s75, %s77
      %p84 = scmp.eq.s32.totalorder %s32, 1
      %p85 = por %p83, %p84
      %p86 = scmp.ne.s32.totalorder %s77, %s78
      %p87 = scmp.eq.s32.totalorder %s32, 0
      %p88 = por %p86, %p87
      %p89 = scmp.ne.s32.totalorder %s77, %s78
      %p90 = scmp.eq.s32.totalorder %s33, 1
      %p91 = por %p89, %p90
      %p93 = scmp.ne.s32.totalorder %s78, %s92
      %p94 = scmp.eq.s32.totalorder %s33, 0
      %p95 = por %p93, %p94
      %s97 = sadd.s32 %s96, 1
      %p100 = scmp.eq.s32.totalorder %s27, 1
      %p101 = scmp.ne.s32.totalorder %s96, %s98
      %p102 = scmp.eq.s32.totalorder %s27, 0
      %p103 = por %p101, %p102
      %p104 = scmp.ne.s32.totalorder %s96, %s98
      %p105 = scmp.eq.s32.totalorder %s32, 1
      %p106 = por %p104, %p105
      %p107 = scmp.ne.s32.totalorder %s98, %s99
      %p108 = scmp.eq.s32.totalorder %s32, 0
      %p109 = por %p107, %p108
      %p110 = scmp.ne.s32.totalorder %s98, %s99
      %p111 = scmp.eq.s32.totalorder %s33, 1
      %p112 = por %p110, %p111
      %p114 = scmp.ne.s32.totalorder %s99, %s113
      %p115 = scmp.eq.s32.totalorder %s33, 0
      %p116 = por %p114, %p115
      %s118 = sadd.s32 %s117, 1
      %p121 = scmp.eq.s32.totalorder %s27, 1
      %p122 = scmp.ne.s32.totalorder %s117, %s119
      %p123 = scmp.eq.s32.totalorder %s27, 0
      %p124 = por %p122, %p123
      %p125 = scmp.ne.s32.totalorder %s117, %s119
      %p126 = scmp.eq.s32.totalorder %s32, 1
      %p127 = por %p125, %p126
      %p128 = scmp.ne.s32.totalorder %s119, %s120
      %p129 = scmp.eq.s32.totalorder %s32, 0
      %p130 = por %p128, %p129
      %p131 = scmp.ne.s32.totalorder %s119, %s120
      %p132 = scmp.eq.s32.totalorder %s33, 1
      %p133 = por %p131, %p132
      %p135 = scmp.ne.s32.totalorder %s120, %s134
      %p136 = scmp.eq.s32.totalorder %s33, 0
      %p137 = por %p135, %p136
      %s139 = sadd.s32 %s138, 1
      %p142 = scmp.eq.s32.totalorder %s27, 1
      %p143 = scmp.ne.s32.totalorder %s138, %s140
      %p144 = scmp.eq.s32.totalorder %s27, 0
      %p145 = por %p143, %p144
      %p146 = scmp.ne.s32.totalorder %s138, %s140
      %p147 = scmp.eq.s32.totalorder %s32, 1
      %p148 = por %p146, %p147
      %p149 = scmp.ne.s32.totalorder %s140, %s141
      %p150 = scmp.eq.s32.totalorder %s32, 0
      %p151 = por %p149, %p150
      %p152 = scmp.ne.s32.totalorder %s140, %s141
      %p153 = scmp.eq.s32.totalorder %s33, 1
      %p154 = por %p152, %p153
      %p156 = scmp.ne.s32.totalorder %s141, %s155
      %p157 = scmp.eq.s32.totalorder %s33, 0
      %p158 = por %p156, %p157
      %s160 = sadd.s32 %s159, 1
      %p163 = scmp.eq.s32.totalorder %s27, 1
      %p164 = scmp.ne.s32.totalorder %s159, %s161
      %p165 = scmp.eq.s32.totalorder %s27, 0
      %p166 = por %p164, %p165
      %p167 = scmp.ne.s32.totalorder %s159, %s161
      %p168 = scmp.eq.s32.totalorder %s32, 1
      %p169 = por %p167, %p168
      %p170 = scmp.ne.s32.totalorder %s161, %s162
      %p171 = scmp.eq.s32.totalorder %s32, 0
      %p172 = por %p170, %p171
      %p173 = scmp.ne.s32.totalorder %s161, %s162
      %p174 = scmp.eq.s32.totalorder %s33, 1
      %p175 = por %p173, %p174
      %p177 = scmp.ne.s32.totalorder %s162, %s176
      %p178 = scmp.eq.s32.totalorder %s33, 0
      %p179 = por %p177, %p178
      %s181 = sadd.s32 %s180, 1
      %p184 = scmp.eq.s32.totalorder %s27, 1
      %p185 = scmp.ne.s32.totalorder %s180, %s182
      %p186 = scmp.eq.s32.totalorder %s27, 0
      %p187 = por %p185, %p186
      %p188 = scmp.ne.s32.totalorder %s180, %s182
      %p189 = scmp.eq.s32.totalorder %s32, 1
      %p190 = por %p188, %p189
      %p191 = scmp.ne.s32.totalorder %s182, %s183
      %p192 = scmp.eq.s32.totalorder %s32, 0
      %p193 = por %p191, %p192
      %p194 = scmp.ne.s32.totalorder %s182, %s183
      %p195 = scmp.eq.s32.totalorder %s33, 1
      %p196 = por %p194, %p195
      %p198 = scmp.ne.s32.totalorder %s183, %s197
      %p199 = scmp.eq.s32.totalorder %s33, 0
      %p200 = por %p198, %p199
      %s202 = sadd.s32 %s201, 1
      %p205 = scmp.eq.s32.totalorder %s27, 1
      %p206 = scmp.ne.s32.totalorder %s201, %s203
      %p207 = scmp.eq.s32.totalorder %s27, 0
      %p208 = por %p206, %p207
      %p209 = scmp.ne.s32.totalorder %s201, %s203
      %p210 = scmp.eq.s32.totalorder %s32, 1
      %p211 = por %p209, %p210
      %p212 = scmp.ne.s32.totalorder %s203, %s204
      %p213 = scmp.eq.s32.totalorder %s32, 0
      %p214 = por %p212, %p213
      %p215 = scmp.ne.s32.totalorder %s203, %s204
      %p216 = scmp.eq.s32.totalorder %s33, 1
      %p217 = por %p215, %p216
      %p219 = scmp.ne.s32.totalorder %s204, %s218
      %p220 = scmp.eq.s32.totalorder %s33, 0
      %p221 = por %p219, %p220
      %s223 = sadd.s32 %s222, 1
      %p226 = scmp.eq.s32.totalorder %s27, 1
      %p227 = scmp.ne.s32.totalorder %s222, %s224
      %p228 = scmp.eq.s32.totalorder %s27, 0
      %p229 = por %p227, %p228
      %p230 = scmp.ne.s32.totalorder %s222, %s224
      %p231 = scmp.eq.s32.totalorder %s32, 1
      %p232 = por %p230, %p231
      %p233 = scmp.ne.s32.totalorder %s224, %s225
      %p234 = scmp.eq.s32.totalorder %s32, 0
      %p235 = por %p233, %p234
      %p236 = scmp.ne.s32.totalorder %s224, %s225
      %p237 = scmp.eq.s32.totalorder %s33, 1
      %p238 = por %p236, %p237
      %p240 = scmp.ne.s32.totalorder %s225, %s239
      %p241 = scmp.eq.s32.totalorder %s33, 0
      %p242 = por %p240, %p241
      %s244 = sadd.s32 %s243, 1
      %p247 = scmp.eq.s32.totalorder %s27, 1
      %p248 = scmp.ne.s32.totalorder %s243, %s245
      %p249 = scmp.eq.s32.totalorder %s27, 0
      %p250 = por %p248, %p249
      %p251 = scmp.ne.s32.totalorder %s243, %s245
      %p252 = scmp.eq.s32.totalorder %s32, 1
      %p253 = por %p251, %p252
      %p254 = scmp.ne.s32.totalorder %s245, %s246
      %p255 = scmp.eq.s32.totalorder %s32, 0
      %p256 = por %p254, %p255
      %p257 = scmp.ne.s32.totalorder %s245, %s246
      %p258 = scmp.eq.s32.totalorder %s33, 1
      %p259 = por %p257, %p258
      %p261 = scmp.ne.s32.totalorder %s246, %s260
      %p262 = scmp.eq.s32.totalorder %s33, 0
      %p263 = por %p261, %p262
      %s265 = sadd.s32 %s264, 1
      %p268 = scmp.eq.s32.totalorder %s27, 1
      %p269 = scmp.ne.s32.totalorder %s264, %s266
      %p270 = scmp.eq.s32.totalorder %s27, 0
      %p271 = por %p269, %p270
      %p272 = scmp.ne.s32.totalorder %s264, %s266
      %p273 = scmp.eq.s32.totalorder %s32, 1
      %p274 = por %p272, %p273
      %p275 = scmp.ne.s32.totalorder %s266, %s267
      %p276 = scmp.eq.s32.totalorder %s32, 0
      %p277 = por %p275, %p276
      %p278 = scmp.ne.s32.totalorder %s266, %s267
      %p279 = scmp.eq.s32.totalorder %s33, 1
      %p280 = por %p278, %p279
      %p282 = scmp.ne.s32.totalorder %s267, %s281
      %p283 = scmp.eq.s32.totalorder %s33, 0
      %p284 = por %p282, %p283
      %s286 = sadd.s32 %s285, 1
      %p289 = scmp.eq.s32.totalorder %s27, 1
      %p290 = scmp.ne.s32.totalorder %s285, %s287
      %p291 = scmp.eq.s32.totalorder %s27, 0
      %p292 = por %p290, %p291
      %p293 = scmp.ne.s32.totalorder %s285, %s287
      %p294 = scmp.eq.s32.totalorder %s32, 1
      %p295 = por %p293, %p294
      %p296 = scmp.ne.s32.totalorder %s287, %s288
      %p297 = scmp.eq.s32.totalorder %s32, 0
      %p298 = por %p296, %p297
      %p299 = scmp.ne.s32.totalorder %s287, %s288
      %p300 = scmp.eq.s32.totalorder %s33, 1
      %p301 = por %p299, %p300
      %p303 = scmp.ne.s32.totalorder %s288, %s302
      %p304 = scmp.eq.s32.totalorder %s33, 0
      %p305 = por %p303, %p304
      %s306 = ssub.s32 %s34, %s46
      %s307 = ssub.s32 %s35, %s42
      %s308 = sor.u32 %s306, %s307
      %p309 = scmp.eq.s32.totalorder %s308, 0
      %s311 = sadd.s32 %s310, 1
      %s312 = scalar_select %p309, %s310, %s311
      %p315 = pneg %p309
      %p316 = scmp.eq.s32.totalorder %s27, 1
      %p317 = por %p315, %p316
      %p318 = scmp.ne.s32.totalorder %s310, %s313
      %p319 = scmp.eq.s32.totalorder %s27, 0
      %p320 = por %p318, %p319
      %p321 = scmp.ne.s32.totalorder %s310, %s313
      %p322 = scmp.eq.s32.totalorder %s32, 1
      %p323 = por %p321, %p322
      %p324 = scmp.ne.s32.totalorder %s313, %s314
      %p325 = scmp.eq.s32.totalorder %s32, 0
      %p326 = por %p324, %p325
      %p327 = scmp.ne.s32.totalorder %s313, %s314
      %p328 = scmp.eq.s32.totalorder %s33, 1
      %p329 = por %p327, %p328
      %p331 = scmp.ne.s32.totalorder %s314, %s330
      %p332 = scmp.eq.s32.totalorder %s33, 0
      %p333 = por %p331, %p332
      %s334 = ssub.s32 %s34, %s46
      %s335 = ssub.s32 %s35, %s42
      %s336 = sor.u32 %s334, %s335
      %p337 = scmp.eq.s32.totalorder %s336, 0
      %s339 = sadd.s32 %s338, 1
      %s340 = scalar_select %p337, %s338, %s339
      %p343 = pneg %p337
      %p344 = scmp.eq.s32.totalorder %s27, 1
      %p345 = por %p343, %p344
      %p346 = scmp.ne.s32.totalorder %s338, %s341
      %p347 = scmp.eq.s32.totalorder %s27, 0
      %p348 = por %p346, %p347
      %p349 = scmp.ne.s32.totalorder %s338, %s341
      %p350 = scmp.eq.s32.totalorder %s32, 1
      %p351 = por %p349, %p350
      %p352 = scmp.ne.s32.totalorder %s341, %s342
      %p353 = scmp.eq.s32.totalorder %s32, 0
      %p354 = por %p352, %p353
      %p355 = scmp.ne.s32.totalorder %s341, %s342
      %p356 = scmp.eq.s32.totalorder %s33, 1
      %p357 = por %p355, %p356
      %p359 = scmp.ne.s32.totalorder %s342, %s358
      %p360 = scmp.eq.s32.totalorder %s33, 0
      %p361 = por %p359, %p360
      %s362 = ssub.s32 %s34, %s46
      %s363 = ssub.s32 %s35, %s42
      %s364 = sor.u32 %s362, %s363
      %p365 = scmp.eq.s32.totalorder %s364, 0
      %s367 = sadd.s32 %s366, 1
      %s368 = scalar_select %p365, %s366, %s367
      %p371 = pneg %p365
      %p372 = scmp.eq.s32.totalorder %s27, 1
      %p373 = por %p371, %p372
      %p374 = scmp.ne.s32.totalorder %s366, %s369
      %p375 = scmp.eq.s32.totalorder %s27, 0
      %p376 = por %p374, %p375
      %p377 = scmp.ne.s32.totalorder %s366, %s369
      %p378 = scmp.eq.s32.totalorder %s32, 1
      %p379 = por %p377, %p378
      %p380 = scmp.ne.s32.totalorder %s369, %s370
      %p381 = scmp.eq.s32.totalorder %s32, 0
      %p382 = por %p380, %p381
      %p383 = scmp.ne.s32.totalorder %s369, %s370
      %p384 = scmp.eq.s32.totalorder %s33, 1
      %p385 = por %p383, %p384
      %p387 = scmp.ne.s32.totalorder %s370, %s386
      %p388 = scmp.eq.s32.totalorder %s33, 0
      %p389 = por %p387, %p388
      %p390 = scmp.le.s32.totalorder 1, %s27
      %p391 = scmp.lt.s32.totalorder %s27, 3
      %p392 = pnand %p390, %p391
      %p393 = pneg %p392
      // Predicated region
      $region9: #{tpu_custom_call.1} parent=5 // pred_check
        _
      $region10: #{tpu_custom_call.1} parent=5 // pred_check_branch
        %395 = sbr.rel (%p392) target = $region12
      $region11: #{tpu_custom_call.1} parent=5 // pred_region
        %s396 = ssub.s32 %s27, 1
        // Predicated region
        $region13: #{tpu_custom_call.1} parent=11 // pred_check
          %p397 = pneg %p88
        $region14: #{tpu_custom_call.1} parent=11 // pred_check_branch
          %399 = sbr.rel (%p397) target = $region16
        $region15: #{tpu_custom_call.1} parent=11 // pred_region
          _
        $region16: #{tpu_custom_call.1} parent=11 // pred_fallthru
          _
        // Predicated region
        $region17: #{tpu_custom_call.1} parent=11 // pred_check
          %p400 = pneg %p109
        $region18: #{tpu_custom_call.1} parent=11 // pred_check_branch
          %402 = sbr.rel (%p400) target = $region20
        $region19: #{tpu_custom_call.1} parent=11 // pred_region
          _
        $region20: #{tpu_custom_call.1} parent=11 // pred_fallthru
          _
        // Predicated region
        $region21: #{tpu_custom_call.1} parent=11 // pred_check
          %p403 = pneg %p130
        $region22: #{tpu_custom_call.1} parent=11 // pred_check_branch
          %405 = sbr.rel (%p403) target = $region24
        $region23: #{tpu_custom_call.1} parent=11 // pred_region
          _
        $region24: #{tpu_custom_call.1} parent=11 // pred_fallthru
          _
        // Predicated region
        $region25: #{tpu_custom_call.1} parent=11 // pred_check
          %p406 = pneg %p151
        $region26: #{tpu_custom_call.1} parent=11 // pred_check_branch
          %408 = sbr.rel (%p406) target = $region28
        $region27: #{tpu_custom_call.1} parent=11 // pred_region
          _
        $region28: #{tpu_custom_call.1} parent=11 // pred_fallthru
          _
        // Predicated region
        $region29: #{tpu_custom_call.1} parent=11 // pred_check
          %p409 = pneg %p172
        $region30: #{tpu_custom_call.1} parent=11 // pred_check_branch
          %411 = sbr.rel (%p409) target = $region32
        $region31: #{tpu_custom_call.1} parent=11 // pred_region
          _
        $region32: #{tpu_custom_call.1} parent=11 // pred_fallthru
          _
        // Predicated region
        $region33: #{tpu_custom_call.1} parent=11 // pred_check
          %p412 = pneg %p193
        $region34: #{tpu_custom_call.1} parent=11 // pred_check_branch
          %414 = sbr.rel (%p412) target = $region36
        $region35: #{tpu_custom_call.1} parent=11 // pred_region
          _
        $region36: #{tpu_custom_call.1} parent=11 // pred_fallthru
          _
        // Predicated region
        $region37: #{tpu_custom_call.1} parent=11 // pred_check
          %p415 = pneg %p214
        $region38: #{tpu_custom_call.1} parent=11 // pred_check_branch
          %417 = sbr.rel (%p415) target = $region40
        $region39: #{tpu_custom_call.1} parent=11 // pred_region
          _
        $region40: #{tpu_custom_call.1} parent=11 // pred_fallthru
          _
        // Predicated region
        $region41: #{tpu_custom_call.1} parent=11 // pred_check
          %p418 = pneg %p235
        $region42: #{tpu_custom_call.1} parent=11 // pred_check_branch
          %420 = sbr.rel (%p418) target = $region44
        $region43: #{tpu_custom_call.1} parent=11 // pred_region
          _
        $region44: #{tpu_custom_call.1} parent=11 // pred_fallthru
          _
        // Predicated region
        $region45: #{tpu_custom_call.1} parent=11 // pred_check
          %p421 = pneg %p256
        $region46: #{tpu_custom_call.1} parent=11 // pred_check_branch
          %423 = sbr.rel (%p421) target = $region48
        $region47: #{tpu_custom_call.1} parent=11 // pred_region
          _
        $region48: #{tpu_custom_call.1} parent=11 // pred_fallthru
          _
        // Predicated region
        $region49: #{tpu_custom_call.1} parent=11 // pred_check
          %p424 = pneg %p277
        $region50: #{tpu_custom_call.1} parent=11 // pred_check_branch
          %426 = sbr.rel (%p424) target = $region52
        $region51: #{tpu_custom_call.1} parent=11 // pred_region
          _
        $region52: #{tpu_custom_call.1} parent=11 // pred_fallthru
          _
        // Predicated region
        $region53: #{tpu_custom_call.1} parent=11 // pred_check
          %p427 = pneg %p298
        $region54: #{tpu_custom_call.1} parent=11 // pred_check_branch
          %429 = sbr.rel (%p427) target = $region56
        $region55: #{tpu_custom_call.1} parent=11 // pred_region
          _
        $region56: #{tpu_custom_call.1} parent=11 // pred_fallthru
          _
      $region12: #{tpu_custom_call.1} parent=5 // pred_fallthru
        _
      %p430 = scmp.lt.s32.totalorder %s27, 2
      // Predicated region
      $region57: #{tpu_custom_call.1} parent=5 // pred_check
        %p431 = pneg %p430
      $region58: #{tpu_custom_call.1} parent=5 // pred_check_branch
        %433 = sbr.rel (%p431) target = $region60
      $region59: #{tpu_custom_call.1} parent=5 // pred_region
        // Predicated region
        $region61: #{tpu_custom_call.1} parent=59 // pred_check
          %p434 = pneg %p61
        $region62: #{tpu_custom_call.1} parent=59 // pred_check_branch
          %436 = sbr.rel (%p434) target = $region64
        $region63: #{tpu_custom_call.1} parent=59 // pred_region
          %p437 = scmp.lt.s32.totalorder %s34, 1
          %s438 = scalar_select %p437, %s34, 1
          %p439 = scmp.lt.s32.totalorder %s35, 0
          %s440 = scalar_select %p439, %s35, 0
          %s441 = sadd.s32 %s440, %s438
          %s442 = smul.addr %s441, 8
          %s443 = scalar_lea.vmem %s0, %s442
        $region64: #{tpu_custom_call.1} parent=59 // pred_fallthru
          _
      $region60: #{tpu_custom_call.1} parent=5 // pred_fallthru
        _
      %p444 = scmp.le.s32.totalorder 1, %s27
      %p445 = scmp.lt.s32.totalorder %s27, 3
      %p446 = pnand %p444, %p445
      %p447 = pneg %p446
      // Predicated region
      $region65: #{tpu_custom_call.1} parent=5 // pred_check
        _
      $region66: #{tpu_custom_call.1} parent=5 // pred_check_branch
        %449 = sbr.rel (%p446) target = $region68
      $region67: #{tpu_custom_call.1} parent=5 // pred_region
        %s450 = ssub.s32 %s27, 1
        %p451 = scmp.lt.s32.totalorder %s36, 1
        %s452 = scalar_select %p451, %s36, 1
        %p453 = scmp.lt.s32.totalorder %s37, 0
        %s454 = scalar_select %p453, %s37, 0
        %s455 = sadd.s32 %s454, %s452
        %s456 = smul.addr %s455, 8
        %s457 = scalar_lea.vmem %s0, %s456
        %p458 = pneg %p67
        %p459 = pneg %p64
        %p460 = pneg %p88
        %p461 = pneg %p85
        %p462 = pneg %p109
        %p463 = pneg %p106
        %p464 = pneg %p130
        %p465 = pneg %p127
        %p466 = pneg %p151
        %p467 = pneg %p148
        %p468 = pneg %p172
        %p469 = pneg %p169
        %p470 = pneg %p193
        %p471 = pneg %p190
        %p472 = pneg %p214
        %p473 = pneg %p211
        %p474 = pneg %p235
        %p475 = pneg %p232
        %p476 = pneg %p256
        %p477 = pneg %p253
        %p478 = pneg %p277
        %p479 = pneg %p274
        %p480 = pneg %p298
        %p481 = pneg %p295
        %p482 = pneg %p326
        %p483 = pneg %p323
        %s484 = sand.u32 %s313, 1
        %s485 = scalar_lea.sflag [#allocation3], %s484
        %s486 = sand.u32 %s313, 1
        %s487 = smul.addr %s486, 8
        %s488 = scalar_lea.vmem [#allocation2], %s487
        %p489 = pneg %p354
        %p490 = pneg %p351
        %s491 = sand.u32 %s32, 1
        %s492 = scalar_lea.sflag [#allocation5], %s491
        %s493 = sand.u32 %s341, 1
        %s494 = smul.addr %s493, 8
        %s495 = scalar_lea.vmem [#allocation4], %s494
        %p496 = pneg %p382
        %p497 = pneg %p379
        %s498 = sand.u32 %s32, 1
        %s499 = scalar_lea.sflag [#allocation5], %s498
        %s500 = sand.u32 %s369, 1
        %s501 = smul.addr %s500, 8
        %s502 = scalar_lea.vmem [#allocation6], %s501
        %p503 = scmp.lt.s32.totalorder %s36, 1
        %s504 = scalar_select %p503, %s36, 1
        %p505 = scmp.lt.s32.totalorder %s37, 0
        %s506 = scalar_select %p505, %s37, 0
        %s507 = sadd.s32 %s506, %s504
        %s508 = smul.addr %s507, 8
        %s509 = scalar_lea.vmem %s0, %s508
        %v510 = vld [vmem:[%s509] sm:$0xff]
        %v511 = vld [vmem:[%s1] sm:$0x1]
        %v512 = vld [vmem:[%s2] sm:$0x1]
        %vm513 = vcmask 261120
        %v514 = vsel %vm513, %v510, 0.0
        %515 = vadd.xlane.f32.xlu0 %v514
        %v516 = vpop.xlane.xlu0 %515
        %v517 = vrcp.pop 32.0
        %v518 = vmul.f32 %v516, %v517
        %v519 = vsub.f32 %v510, %v518
        %v520 = vmul.f32 %v519, %v519
        %v521 = vsel %vm513, %v520, 0.0
        %522 = vadd.xlane.f32.xlu0 %v521
        %v523 = vpop.xlane.xlu0 %522
        %v524 = vmul.f32 %v523, %v517
        %v525 = vadd.f32 %v524, 1e-05
        %v526 = vrsqrt.pop %v525
        %v527 = vmul.f32 %v519, %v526
        %v529 = vlaneseq
        %v530 = vshrl.u32 %v529, 7
        %v531 = vsub.s32 0, %v530
        %v532 = vrot.slane %v511, %v531
        %v534 = vmul.f32 %v527, %v532
        %v536 = vlaneseq
        %v537 = vshrl.u32 %v536, 7
        %v538 = vsub.s32 0, %v537
        %v539 = vrot.slane %v512, %v538
        %v541 = vadd.f32 %v534, %v539
        %v542 = vld [vmem:[%s3] sm:$0xff]
        %v543 = vld [vmem:[%s3 + $0x8] sm:$0xff]
        %v544 = vld [vmem:[%s3 + $0x10] sm:$0xff]
        %v545 = vld [vmem:[%s3 + $0x18] sm:$0xff]
        %v547 = vsel %vm513, %v541, 0
        %549 = vmatprep.subr.mxu0 0.0
        %550 = vmatpush1.msra.mxu0 %v542
        %551 = vmatprep.subr.mxu0 0.0
        %552 = vmatpush1.msra.mxu0 %v543
        %553 = vmatprep.subr.mxu0 0.0
        %554 = vmatpush1.msra.mxu0 %v544
        %555 = vmatprep.subr.mxu0 0.0
        %556 = vmatpush1.msra.mxu0 %v545
        %557 = vmatprep.subr.mxu0 0.0
        %558 = vmatpush1.msra.mxu0 0.0
        %559 = vmatprep.subr.mxu0 0.0
        %560 = vmatpush1.msra.mxu0 0.0
        %561 = vmatprep.subr.mxu0 0.0
        %562 = vmatpush1.msra.mxu0 0.0
        %563 = vmatprep.subr.mxu0 0.0
        %564 = vmatpush1.msra.mxu0 0.0
        %565 = vmatprep.subr.mxu0 0.0
        %566 = vmatpush1.msra.mxu0 0.0
        %567 = vmatprep.subr.mxu0 0.0
        %568 = vmatpush1.msra.mxu0 0.0
        %569 = vmatprep.subr.mxu0 0.0
        %570 = vmatpush1.msra.mxu0 0.0
        %571 = vmatprep.subr.mxu0 0.0
        %572 = vmatpush1.msra.mxu0 0.0
        %573 = vmatprep.subr.mxu0 0.0
        %574 = vmatpush1.msra.mxu0 0.0
        %575 = vmatprep.subr.mxu0 0.0
        %576 = vmatpush1.msra.mxu0 0.0
        %577 = vmatprep.subr.mxu0 0.0
        %578 = vmatpush1.msra.mxu0 0.0
        %579 = vmatprep.subr.mxu0 0.0
        %580 = vmatpush1.msra.mxu0 0.0
        %581 = vmatprep.subr.mxu0 0.0
        %582 = vmatpush1.msra.mxu0 0.0
        %583 = vmatprep.subr.mxu0 0.0
        %584 = vmatpush1.msra.mxu0 0.0
        %585 = vmatprep.subr.mxu0 0.0
        %586 = vmatpush1.msra.mxu0 0.0
        %587 = vmatprep.subr.mxu0 0.0
        %588 = vmatpush1.msra.mxu0 0.0
        %589 = vmatprep.subr.mxu0 0.0
        %590 = vmatpush1.msra.mxu0 0.0
        %591 = vmatprep.subr.mxu0 0.0
        %592 = vmatpush1.msra.mxu0 0.0
        %593 = vmatprep.subr.mxu0 0.0
        %594 = vmatpush1.msra.mxu0 0.0
        %595 = vmatprep.subr.mxu0 0.0
        %596 = vmatpush1.msra.mxu0 0.0
        %597 = vmatprep.subr.mxu0 0.0
        %598 = vmatpush1.msra.mxu0 0.0
        %599 = vmatprep.subr.mxu0 0.0
        %600 = vmatpush1.msra.mxu0 0.0
        %601 = vmatprep.subr.mxu0 0.0
        %602 = vmatpush1.msra.mxu0 0.0
        %603 = vmatprep.subr.mxu0 0.0
        %604 = vmatpush1.msra.mxu0 0.0
        %605 = vmatprep.subr.mxu0 0.0
        %606 = vmatpush1.msra.mxu0 0.0
        %607 = vmatprep.subr.mxu0 0.0
        %608 = vmatpush1.msra.mxu0 0.0
        %609 = vmatprep.subr.mxu0 0.0
        %610 = vmatpush1.msra.mxu0 0.0
        %611 = vmatprep.subr.mxu0 0.0
        %612 = vmatpush1.msra.mxu0 0.0
        %613 = vmatprep.mubr.f32.mxu0 0.0
        %614 = vmatmul.mubr.f32.gmra.mrb[0].mxu0 %v547
        %v615 = vpop.f32.mrb[0].mxu0
        %v616 = vadd.f32 0.0, %v615
        %v617 = vpop.f32.mrb[0].mxu0
        %618 = vdwg.mxu0
        %v619 = vld [vmem:[%s4] sm:$0x1]
        %v620 = vld [vmem:[%s5] sm:$0x1]
        %vm621 = vcmask 130048
        %v622 = vsel %vm621, %v616, 0.0
        %623 = vadd.xlane.f32.xlu0 %v622
        %v624 = vpop.xlane.xlu0 %623
        %v625 = vrcp.pop 16.0
        %v626 = vmul.f32 %v624, %v625
        %v627 = vsub.f32 %v616, %v626
        %v628 = vmul.f32 %v627, %v627
        %v629 = vsel %vm621, %v628, 0.0
        %630 = vadd.xlane.f32.xlu0 %v629
        %v631 = vpop.xlane.xlu0 %630
        %v632 = vmul.f32 %v631, %v625
        %v633 = vadd.f32 %v632, 1e-05
        %v634 = vrsqrt.pop %v633
        %v635 = vmul.f32 %v627, %v634
        %v637 = vlaneseq
        %v638 = vshrl.u32 %v637, 7
        %v639 = vsub.s32 0, %v638
        %v640 = vrot.slane %v619, %v639
        %v642 = vmul.f32 %v635, %v640
        %v644 = vlaneseq
        %v645 = vshrl.u32 %v644, 7
        %v646 = vsub.s32 0, %v645
        %v647 = vrot.slane %v620, %v646
        %v649 = vadd.f32 %v642, %v647
        %v650 = vld [vmem:[%s6] sm:$0xff]
        %v651 = vld [vmem:[%s6 + $0x8] sm:$0xff]
        %v653 = vsel %vm621, %v649, 0
        %655 = vmatprep.subr.mxu0 0.0
        %656 = vmatpush1.msra.mxu0 %v650
        %657 = vmatprep.subr.mxu0 0.0
        %658 = vmatpush1.msra.mxu0 %v651
        %659 = vmatprep.subr.mxu0 0.0
        %660 = vmatpush1.msra.mxu0 0.0
        %661 = vmatprep.subr.mxu0 0.0
        %662 = vmatpush1.msra.mxu0 0.0
        %663 = vmatprep.subr.mxu0 0.0
        %664 = vmatpush1.msra.mxu0 0.0
        %665 = vmatprep.subr.mxu0 0.0
        %666 = vmatpush1.msra.mxu0 0.0
        %667 = vmatprep.subr.mxu0 0.0
        %668 = vmatpush1.msra.mxu0 0.0
        %669 = vmatprep.subr.mxu0 0.0
        %670 = vmatpush1.msra.mxu0 0.0
        %671 = vmatprep.subr.mxu0 0.0
        %672 = vmatpush1.msra.mxu0 0.0
        %673 = vmatprep.subr.mxu0 0.0
        %674 = vmatpush1.msra.mxu0 0.0
        %675 = vmatprep.subr.mxu0 0.0
        %676 = vmatpush1.msra.mxu0 0.0
        %677 = vmatprep.subr.mxu0 0.0
        %678 = vmatpush1.msra.mxu0 0.0
        %679 = vmatprep.subr.mxu0 0.0
        %680 = vmatpush1.msra.mxu0 0.0
        %681 = vmatprep.subr.mxu0 0.0
        %682 = vmatpush1.msra.mxu0 0.0
        %683 = vmatprep.subr.mxu0 0.0
        %684 = vmatpush1.msra.mxu0 0.0
        %685 = vmatprep.subr.mxu0 0.0
        %686 = vmatpush1.msra.mxu0 0.0
        %687 = vmatprep.subr.mxu0 0.0
        %688 = vmatpush1.msra.mxu0 0.0
        %689 = vmatprep.subr.mxu0 0.0
        %690 = vmatpush1.msra.mxu0 0.0
        %691 = vmatprep.subr.mxu0 0.0
        %692 = vmatpush1.msra.mxu0 0.0
        %693 = vmatprep.subr.mxu0 0.0
        %694 = vmatpush1.msra.mxu0 0.0
        %695 = vmatprep.subr.mxu0 0.0
        %696 = vmatpush1.msra.mxu0 0.0
        %697 = vmatprep.subr.mxu0 0.0
        %698 = vmatpush1.msra.mxu0 0.0
        %699 = vmatprep.subr.mxu0 0.0
        %700 = vmatpush1.msra.mxu0 0.0
        %701 = vmatprep.subr.mxu0 0.0
        %702 = vmatpush1.msra.mxu0 0.0
        %703 = vmatprep.subr.mxu0 0.0
        %704 = vmatpush1.msra.mxu0 0.0
        %705 = vmatprep.subr.mxu0 0.0
        %706 = vmatpush1.msra.mxu0 0.0
        %707 = vmatprep.subr.mxu0 0.0
        %708 = vmatpush1.msra.mxu0 0.0
        %709 = vmatprep.subr.mxu0 0.0
        %710 = vmatpush1.msra.mxu0 0.0
        %711 = vmatprep.subr.mxu0 0.0
        %712 = vmatpush1.msra.mxu0 0.0
        %713 = vmatprep.subr.mxu0 0.0
        %714 = vmatpush1.msra.mxu0 0.0
        %715 = vmatprep.subr.mxu0 0.0
        %716 = vmatpush1.msra.mxu0 0.0
        %717 = vmatprep.subr.mxu0 0.0
        %718 = vmatpush1.msra.mxu0 0.0
        %719 = vmatprep.mubr.f32.mxu0 0.0
        %720 = vmatmul.mubr.f32.gmra.mrb[0].mxu0 %v653
        %v721 = vpop.f32.mrb[0].mxu0
        %v722 = vadd.f32 0.0, %v721
        %v723 = vpop.f32.mrb[0].mxu0
        %724 = vdwg.mxu0
        %725 = vst.msk [vmem:[%s488] sm:$0xff] %vm513, %v722
        %v726 = vld [vmem:[%s7] sm:$0xff]
        %v727 = vld [vmem:[%s7 + $0x8] sm:$0xff]
        %v728 = vld [vmem:[%s7 + $0x10] sm:$0xff]
        %v729 = vld [vmem:[%s7 + $0x18] sm:$0xff]
        %730 = vmatprep.subr.mxu0 0.0
        %731 = vmatpush1.msra.mxu0 %v726
        %732 = vmatprep.subr.mxu0 0.0
        %733 = vmatpush1.msra.mxu0 %v727
        %734 = vmatprep.subr.mxu0 0.0
        %735 = vmatpush1.msra.mxu0 %v728
        %736 = vmatprep.subr.mxu0 0.0
        %737 = vmatpush1.msra.mxu0 %v729
        %738 = vmatprep.subr.mxu0 0.0
        %739 = vmatpush1.msra.mxu0 0.0
        %740 = vmatprep.subr.mxu0 0.0
        %741 = vmatpush1.msra.mxu0 0.0
        %742 = vmatprep.subr.mxu0 0.0
        %743 = vmatpush1.msra.mxu0 0.0
        %744 = vmatprep.subr.mxu0 0.0
        %745 = vmatpush1.msra.mxu0 0.0
        %746 = vmatprep.subr.mxu0 0.0
        %747 = vmatpush1.msra.mxu0 0.0
        %748 = vmatprep.subr.mxu0 0.0
        %749 = vmatpush1.msra.mxu0 0.0
        %750 = vmatprep.subr.mxu0 0.0
        %751 = vmatpush1.msra.mxu0 0.0
        %752 = vmatprep.subr.mxu0 0.0
        %753 = vmatpush1.msra.mxu0 0.0
        %754 = vmatprep.subr.mxu0 0.0
        %755 = vmatpush1.msra.mxu0 0.0
        %756 = vmatprep.subr.mxu0 0.0
        %757 = vmatpush1.msra.mxu0 0.0
        %758 = vmatprep.subr.mxu0 0.0
        %759 = vmatpush1.msra.mxu0 0.0
        %760 = vmatprep.subr.mxu0 0.0
        %761 = vmatpush1.msra.mxu0 0.0
        %762 = vmatprep.subr.mxu0 0.0
        %763 = vmatpush1.msra.mxu0 0.0
        %764 = vmatprep.subr.mxu0 0.0
        %765 = vmatpush1.msra.mxu0 0.0
        %766 = vmatprep.subr.mxu0 0.0
        %767 = vmatpush1.msra.mxu0 0.0
        %768 = vmatprep.subr.mxu0 0.0
        %769 = vmatpush1.msra.mxu0 0.0
        %770 = vmatprep.subr.mxu0 0.0
        %771 = vmatpush1.msra.mxu0 0.0
        %772 = vmatprep.subr.mxu0 0.0
        %773 = vmatpush1.msra.mxu0 0.0
        %774 = vmatprep.subr.mxu0 0.0
        %775 = vmatpush1.msra.mxu0 0.0
        %776 = vmatprep.subr.mxu0 0.0
        %777 = vmatpush1.msra.mxu0 0.0
        %778 = vmatprep.subr.mxu0 0.0
        %779 = vmatpush1.msra.mxu0 0.0
        %780 = vmatprep.subr.mxu0 0.0
        %781 = vmatpush1.msra.mxu0 0.0
        %782 = vmatprep.subr.mxu0 0.0
        %783 = vmatpush1.msra.mxu0 0.0
        %784 = vmatprep.subr.mxu0 0.0
        %785 = vmatpush1.msra.mxu0 0.0
        %786 = vmatprep.subr.mxu0 0.0
        %787 = vmatpush1.msra.mxu0 0.0
        %788 = vmatprep.subr.mxu0 0.0
        %789 = vmatpush1.msra.mxu0 0.0
        %790 = vmatprep.subr.mxu0 0.0
        %791 = vmatpush1.msra.mxu0 0.0
        %792 = vmatprep.subr.mxu0 0.0
        %793 = vmatpush1.msra.mxu0 0.0
        %794 = vmatprep.mubr.f32.mxu0 0.0
        %795 = vmatmul.mubr.f32.gmra.mrb[0].mxu0 %v547
        %v796 = vpop.f32.mrb[0].mxu0
        %v797 = vadd.f32 0.0, %v796
        %v798 = vpop.f32.mrb[0].mxu0
        %799 = vdwg.mxu0
        %v800 = vld [vmem:[%s8] sm:$0x1]
        %v801 = vld [vmem:[%s9] sm:$0x1]
        %v802 = vsel %vm621, %v797, 0.0
        %803 = vadd.xlane.f32.xlu0 %v802
        %v804 = vpop.xlane.xlu0 %803
        %v805 = vmul.f32 %v804, %v625
        %v806 = vsub.f32 %v797, %v805
        %v807 = vmul.f32 %v806, %v806
        %v808 = vsel %vm621, %v807, 0.0
        %809 = vadd.xlane.f32.xlu0 %v808
        %v810 = vpop.xlane.xlu0 %809
        %v811 = vmul.f32 %v810, %v625
        %v812 = vadd.f32 %v811, 1e-05
        %v813 = vrsqrt.pop %v812
        %v814 = vmul.f32 %v806, %v813
        %v816 = vlaneseq
        %v817 = vshrl.u32 %v816, 7
        %v818 = vsub.s32 0, %v817
        %v819 = vrot.slane %v800, %v818
        %v821 = vmul.f32 %v814, %v819
        %v823 = vlaneseq
        %v824 = vshrl.u32 %v823, 7
        %v825 = vsub.s32 0, %v824
        %v826 = vrot.slane %v801, %v825
        %v828 = vadd.f32 %v821, %v826
        %v829 = vld [vmem:[%s10] sm:$0xff]
        %v830 = vld [vmem:[%s10 + $0x8] sm:$0xff]
        %v832 = vsel %vm621, %v828, 0
        %834 = vmatprep.subr.mxu0 0.0
        %835 = vmatpush1.msra.mxu0 %v829
        %836 = vmatprep.subr.mxu0 0.0
        %837 = vmatpush1.msra.mxu0 %v830
        %838 = vmatprep.subr.mxu0 0.0
        %839 = vmatpush1.msra.mxu0 0.0
        %840 = vmatprep.subr.mxu0 0.0
        %841 = vmatpush1.msra.mxu0 0.0
        %842 = vmatprep.subr.mxu0 0.0
        %843 = vmatpush1.msra.mxu0 0.0
        %844 = vmatprep.subr.mxu0 0.0
        %845 = vmatpush1.msra.mxu0 0.0
        %846 = vmatprep.subr.mxu0 0.0
        %847 = vmatpush1.msra.mxu0 0.0
        %848 = vmatprep.subr.mxu0 0.0
        %849 = vmatpush1.msra.mxu0 0.0
        %850 = vmatprep.subr.mxu0 0.0
        %851 = vmatpush1.msra.mxu0 0.0
        %852 = vmatprep.subr.mxu0 0.0
        %853 = vmatpush1.msra.mxu0 0.0
        %854 = vmatprep.subr.mxu0 0.0
        %855 = vmatpush1.msra.mxu0 0.0
        %856 = vmatprep.subr.mxu0 0.0
        %857 = vmatpush1.msra.mxu0 0.0
        %858 = vmatprep.subr.mxu0 0.0
        %859 = vmatpush1.msra.mxu0 0.0
        %860 = vmatprep.subr.mxu0 0.0
        %861 = vmatpush1.msra.mxu0 0.0
        %862 = vmatprep.subr.mxu0 0.0
        %863 = vmatpush1.msra.mxu0 0.0
        %864 = vmatprep.subr.mxu0 0.0
        %865 = vmatpush1.msra.mxu0 0.0
        %866 = vmatprep.subr.mxu0 0.0
        %867 = vmatpush1.msra.mxu0 0.0
        %868 = vmatprep.subr.mxu0 0.0
        %869 = vmatpush1.msra.mxu0 0.0
        %870 = vmatprep.subr.mxu0 0.0
        %871 = vmatpush1.msra.mxu0 0.0
        %872 = vmatprep.subr.mxu0 0.0
        %873 = vmatpush1.msra.mxu0 0.0
        %874 = vmatprep.subr.mxu0 0.0
        %875 = vmatpush1.msra.mxu0 0.0
        %876 = vmatprep.subr.mxu0 0.0
        %877 = vmatpush1.msra.mxu0 0.0
        %878 = vmatprep.subr.mxu0 0.0
        %879 = vmatpush1.msra.mxu0 0.0
        %880 = vmatprep.subr.mxu0 0.0
        %881 = vmatpush1.msra.mxu0 0.0
        %882 = vmatprep.subr.mxu0 0.0
        %883 = vmatpush1.msra.mxu0 0.0
        %884 = vmatprep.subr.mxu0 0.0
        %885 = vmatpush1.msra.mxu0 0.0
        %886 = vmatprep.subr.mxu0 0.0
        %887 = vmatpush1.msra.mxu0 0.0
        %888 = vmatprep.subr.mxu0 0.0
        %889 = vmatpush1.msra.mxu0 0.0
        %890 = vmatprep.subr.mxu0 0.0
        %891 = vmatpush1.msra.mxu0 0.0
        %892 = vmatprep.subr.mxu0 0.0
        %893 = vmatpush1.msra.mxu0 0.0
        %894 = vmatprep.subr.mxu0 0.0
        %895 = vmatpush1.msra.mxu0 0.0
        %896 = vmatprep.subr.mxu0 0.0
        %897 = vmatpush1.msra.mxu0 0.0
        %898 = vmatprep.mubr.f32.mxu0 0.0
        %899 = vmatmul.mubr.f32.gmra.mrb[0].mxu0 %v832
        %v900 = vpop.f32.mrb[0].mxu0
        %v901 = vadd.f32 0.0, %v900
        %v902 = vpop.f32.mrb[0].mxu0
        %903 = vdwg.mxu0
        %904 = vst.msk [vmem:[%s495] sm:$0xff] %vm513, %v901
        %v905 = vld [vmem:[%s11] sm:$0xff]
        %v906 = vld [vmem:[%s11 + $0x8] sm:$0xff]
        %907 = vmatprep.subr.mxu0 0.0
        %908 = vmatpush1.msra.mxu0 %v905
        %909 = vmatprep.subr.mxu0 0.0
        %910 = vmatpush1.msra.mxu0 %v906
        %911 = vmatprep.subr.mxu0 0.0
        %912 = vmatpush1.msra.mxu0 0.0
        %913 = vmatprep.subr.mxu0 0.0
        %914 = vmatpush1.msra.mxu0 0.0
        %915 = vmatprep.subr.mxu0 0.0
        %916 = vmatpush1.msra.mxu0 0.0
        %917 = vmatprep.subr.mxu0 0.0
        %918 = vmatpush1.msra.mxu0 0.0
        %919 = vmatprep.subr.mxu0 0.0
        %920 = vmatpush1.msra.mxu0 0.0
        %921 = vmatprep.subr.mxu0 0.0
        %922 = vmatpush1.msra.mxu0 0.0
        %923 = vmatprep.subr.mxu0 0.0
        %924 = vmatpush1.msra.mxu0 0.0
        %925 = vmatprep.subr.mxu0 0.0
        %926 = vmatpush1.msra.mxu0 0.0
        %927 = vmatprep.subr.mxu0 0.0
        %928 = vmatpush1.msra.mxu0 0.0
        %929 = vmatprep.subr.mxu0 0.0
        %930 = vmatpush1.msra.mxu0 0.0
        %931 = vmatprep.subr.mxu0 0.0
        %932 = vmatpush1.msra.mxu0 0.0
        %933 = vmatprep.subr.mxu0 0.0
        %934 = vmatpush1.msra.mxu0 0.0
        %935 = vmatprep.subr.mxu0 0.0
        %936 = vmatpush1.msra.mxu0 0.0
        %937 = vmatprep.subr.mxu0 0.0
        %938 = vmatpush1.msra.mxu0 0.0
        %939 = vmatprep.subr.mxu0 0.0
        %940 = vmatpush1.msra.mxu0 0.0
        %941 = vmatprep.subr.mxu0 0.0
        %942 = vmatpush1.msra.mxu0 0.0
        %943 = vmatprep.subr.mxu0 0.0
        %944 = vmatpush1.msra.mxu0 0.0
        %945 = vmatprep.subr.mxu0 0.0
        %946 = vmatpush1.msra.mxu0 0.0
        %947 = vmatprep.subr.mxu0 0.0
        %948 = vmatpush1.msra.mxu0 0.0
        %949 = vmatprep.subr.mxu0 0.0
        %950 = vmatpush1.msra.mxu0 0.0
        %951 = vmatprep.subr.mxu0 0.0
        %952 = vmatpush1.msra.mxu0 0.0
        %953 = vmatprep.subr.mxu0 0.0
        %954 = vmatpush1.msra.mxu0 0.0
        %955 = vmatprep.subr.mxu0 0.0
        %956 = vmatpush1.msra.mxu0 0.0
        %957 = vmatprep.subr.mxu0 0.0
        %958 = vmatpush1.msra.mxu0 0.0
        %959 = vmatprep.subr.mxu0 0.0
        %960 = vmatpush1.msra.mxu0 0.0
        %961 = vmatprep.subr.mxu0 0.0
        %962 = vmatpush1.msra.mxu0 0.0
        %963 = vmatprep.subr.mxu0 0.0
        %964 = vmatpush1.msra.mxu0 0.0
        %965 = vmatprep.subr.mxu0 0.0
        %966 = vmatpush1.msra.mxu0 0.0
        %967 = vmatprep.subr.mxu0 0.0
        %968 = vmatpush1.msra.mxu0 0.0
        %969 = vmatprep.subr.mxu0 0.0
        %970 = vmatpush1.msra.mxu0 0.0
        %971 = vmatprep.mubr.f32.mxu0 0.0
        %972 = vmatmul.mubr.f32.gmra.mrb[0].mxu0 %v832
        %v973 = vpop.f32.mrb[0].mxu0
        %v974 = vadd.f32 0.0, %v973
        %v975 = vpop.f32.mrb[0].mxu0
        %976 = vdwg.mxu0
        %977 = vst.msk [vmem:[%s502] sm:$0xff] %vm513, %v974
        %s978 = sand.u32 %s313, 1
        %s979 = scalar_lea.sflag [#allocation3], %s978
        %s980 = sand.u32 %s313, 1
        %s981 = smul.addr %s980, 8
        %s982 = scalar_lea.vmem [#allocation2], %s981
        %s983 = sand.u32 %s32, 1
        %s984 = scalar_lea.sflag [#allocation5], %s983
        %s985 = sand.u32 %s341, 1
        %s986 = smul.addr %s985, 8
        %s987 = scalar_lea.vmem [#allocation4], %s986
        %s988 = sand.u32 %s32, 1
        %s989 = scalar_lea.sflag [#allocation5], %s988
        %s990 = sand.u32 %s369, 1
        %s991 = smul.addr %s990, 8
        %s992 = scalar_lea.vmem [#allocation6], %s991
        // Predicated region
        $region69: #{tpu_custom_call.1} parent=67 // pred_check
          %p993 = pneg %p323
        $region70: #{tpu_custom_call.1} parent=67 // pred_check_branch
          %995 = sbr.rel (%p993) target = $region72
        $region71: #{tpu_custom_call.1} parent=67 // pred_region
          %s997 = ssub.s32 128, 128
          %998 = vsyncadd %s979, %s997
          %s999 = sadd.s32 %s37, %s36
          %s1000 = smul.addr %s999, 128
          %s1001 = scalar_lea.hbm %s12, %s1000
          %s1003 = sshll.u32 %s982, 4
          %s1004 = int_to_ptr.vmem [resolvable:$true] %s1003
          %1006 = dma.vmem_to_hbm [thread:$0]  %s1004, 128, %s1001, %s979
        $region72: #{tpu_custom_call.1} parent=67 // pred_fallthru
          _
        // Predicated region
        $region73: #{tpu_custom_call.1} parent=67 // pred_check
          %p1007 = pneg %p351
        $region74: #{tpu_custom_call.1} parent=67 // pred_check_branch
          %1009 = sbr.rel (%p1007) target = $region76
        $region75: #{tpu_custom_call.1} parent=67 // pred_region
          %s1011 = ssub.s32 128, 128
          %1012 = vsyncadd %s984, %s1011
          %s1013 = sadd.s32 %s37, %s36
          %s1014 = smul.addr %s1013, 128
          %s1015 = scalar_lea.hbm %s13, %s1014
          %s1017 = sshll.u32 %s987, 4
          %s1018 = int_to_ptr.vmem [resolvable:$true] %s1017
          %1020 = dma.vmem_to_hbm [thread:$0]  %s1018, 128, %s1015, %s984
        $region76: #{tpu_custom_call.1} parent=67 // pred_fallthru
          _
        // Predicated region
        $region77: #{tpu_custom_call.1} parent=67 // pred_check
          %p1021 = pneg %p379
        $region78: #{tpu_custom_call.1} parent=67 // pred_check_branch
          %1023 = sbr.rel (%p1021) target = $region80
        $region79: #{tpu_custom_call.1} parent=67 // pred_region
          %s1025 = ssub.s32 128, 128
          %1026 = vsyncadd %s989, %s1025
          %s1027 = sadd.s32 %s37, %s36
          %s1028 = smul.addr %s1027, 128
          %s1029 = scalar_lea.hbm %s14, %s1028
          %s1031 = sshll.u32 %s992, 4
          %s1032 = int_to_ptr.vmem [resolvable:$true] %s1031
          %1034 = dma.vmem_to_hbm [thread:$0]  %s1032, 128, %s1029, %s989
        $region80: #{tpu_custom_call.1} parent=67 // pred_fallthru
          _
      $region68: #{tpu_custom_call.1} parent=5 // pred_fallthru
        _
      %p1035 = scmp.le.s32.totalorder 2, %s27
      // Predicated region
      $region81: #{tpu_custom_call.1} parent=5 // pred_check
        %p1036 = pneg %p1035
      $region82: #{tpu_custom_call.1} parent=5 // pred_check_branch
        %1038 = sbr.rel (%p1036) target = $region84
      $region83: #{tpu_custom_call.1} parent=5 // pred_region
        %s1039 = ssub.s32 %s27, 2
        // Predicated region
        $region85: #{tpu_custom_call.1} parent=83 // pred_check
          %p1040 = pneg %p329
        $region86: #{tpu_custom_call.1} parent=83 // pred_check_branch
          %1042 = sbr.rel (%p1040) target = $region88
        $region87: #{tpu_custom_call.1} parent=83 // pred_region
          %s1043 = sand.u32 %s314, 1
          %s1044 = scalar_lea.sflag [#allocation3], %s1043
          %s1045 = sand.u32 %s314, 1
          %s1046 = smul.addr %s1045, 8
          %s1047 = scalar_lea.vmem [#allocation2], %s1046
          %1048 = dma.done %s1044, 128
        $region88: #{tpu_custom_call.1} parent=83 // pred_fallthru
          _
        // Predicated region
        $region89: #{tpu_custom_call.1} parent=83 // pred_check
          %p1049 = pneg %p357
        $region90: #{tpu_custom_call.1} parent=83 // pred_check_branch
          %1051 = sbr.rel (%p1049) target = $region92
        $region91: #{tpu_custom_call.1} parent=83 // pred_region
          %s1052 = sand.u32 %s33, 1
          %s1053 = scalar_lea.sflag [#allocation5], %s1052
          %s1054 = sand.u32 %s342, 1
          %s1055 = smul.addr %s1054, 8
          %s1056 = scalar_lea.vmem [#allocation4], %s1055
          %1057 = dma.done %s1053, 128
        $region92: #{tpu_custom_call.1} parent=83 // pred_fallthru
          _
        // Predicated region
        $region93: #{tpu_custom_call.1} parent=83 // pred_check
          %p1058 = pneg %p385
        $region94: #{tpu_custom_call.1} parent=83 // pred_check_branch
          %1060 = sbr.rel (%p1058) target = $region96
        $region95: #{tpu_custom_call.1} parent=83 // pred_region
          %s1061 = sand.u32 %s33, 1
          %s1062 = scalar_lea.sflag [#allocation5], %s1061
          %s1063 = sand.u32 %s370, 1
          %s1064 = smul.addr %s1063, 8
          %s1065 = scalar_lea.vmem [#allocation6], %s1064
          %1066 = dma.done %s1062, 128
        $region96: #{tpu_custom_call.1} parent=83 // pred_fallthru
          _
      $region84: #{tpu_custom_call.1} parent=5 // pred_fallthru
        _
    $region6: #{tpu_custom_call.1} parent=1 // loop_footer
      %s31 = sadd.s32 1, %s27
    $region7: #{tpu_custom_call.1} parent=1 // loop_footer_branch
      %26 = sbr.rel target = $region3
    $region8: #{tpu_custom_call.1} parent=1 // loop_exit
      _
    %1067 = vsyncpa [#allocation3], 1
    %s1068 = scalar_lea.sflag [#allocation3], 1
    %1069 = vsyncpa %s1068, 1
    %1070 = vsyncpa [#allocation5], 1
    %s1071 = scalar_lea.sflag [#allocation5], 1
    %1072 = vsyncpa %s1071, 1

</llo_original>
